<compile_context>
chip_gen: v7x
topology: tpu7x:2x2x1
jax: 0.10.0
libtpu: 0.0.40
codegen_flags: <defaults>
</compile_context>

<pallas_src>
import functools

import jax
import jax.numpy as jnp
from jax.experimental import pallas as pl
from jax.experimental.pallas import tpu as pltpu


def _resblock_kernel(x_ref, w1_ref, b1_ref, w2_ref, b2_ref, w3s_ref, b3s_ref,
                     o_ref, hp_ref, *, identity_skip, mm_dtype):
    # x_ref block: (1, H, W, Cin) -- one image per grid step.
    H, W, Cin = x_ref.shape[1], x_ref.shape[2], x_ref.shape[3]
    Cm = w1_ref.shape[1]
    Cout = w3s_ref.shape[1]

    x = x_ref[0]                                   # (H, W, Cin), f32
    xf = x.reshape(H * W, Cin)                     # f32, reused by the skip path

    # --- conv1 (1x1) + ReLU --- (bf16 MXU operands, f32 accumulate/elementwise)
    h1 = jnp.dot(xf.astype(mm_dtype), w1_ref[...],
                 preferred_element_type=jnp.float32) + b1_ref[...]
    h1 = jnp.maximum(h1, 0.0)                      # (H*W, Cm)

    # --- conv2 (3x3, SAME) as a single im2col matmul ---
    # Padded activation lives in a VMEM scratch; memset is cheap and keeps the
    # kernel correct when the parallel grid is split across cores.
    hp_ref[...] = jnp.zeros_like(hp_ref)                       # (H+2, W+2, Cm)
    hp_ref[1:H + 1, 1:W + 1, :] = h1.reshape(H, W, Cm)

    patches = [hp_ref[ky:ky + H, kx:kx + W, :].reshape(H * W, Cm)
               for ky in range(3) for kx in range(3)]
    pm = jnp.concatenate(patches, axis=-1).astype(mm_dtype)    # (H*W, 9*Cm)
    h2 = jnp.dot(pm, w2_ref[...],
                 preferred_element_type=jnp.float32) + b2_ref[...]   # (H*W, Cm)

    # --- conv3 (1x1) fused with the skip path ---
    if identity_skip:
        # skip_layer is None in PyTorch -> plain add, no matmul for the skip.
        out = (jnp.dot(h2.astype(mm_dtype), w3s_ref[...],
                       preferred_element_type=jnp.float32)
               + b3s_ref[...] + xf)
    else:
        # [h2 | x] @ [[w3],[ws]]  (biases were pre-summed in the wrapper)
        a = jnp.concatenate([h2, xf], axis=-1).astype(mm_dtype)  # (H*W, Cm+Cin)
        out = jnp.dot(a, w3s_ref[...],
                      preferred_element_type=jnp.float32) + b3s_ref[...]

    o_ref[0] = out.reshape(H, W, Cout).astype(o_ref.dtype)


def resblock_forward(x_nchw, params, *, mm_dtype=jnp.bfloat16):
    """ResBlock forward.

    Args:
      x_nchw: (N, Cin, H, W) float32 input (PyTorch layout).
      params: dict of weights in matmul layout (see init_params). `ws`/`bs`
              are absent when in_channels == out_channels (identity skip).
    Returns:
      (N, Cout, H, W) float32 output.
    """
    w1, b1, w2, b2, w3, b3 = (params[k] for k in ("w1", "b1", "w2", "b2", "w3", "b3"))
    N, Cin, H, W = x_nchw.shape
    Cm = w1.shape[1]
    Cout = w3.shape[1]
    identity_skip = "ws" not in params

    # Fold weights for the fused matmuls (done once, outside the kernel).
    w2f = w2.reshape(9 * Cm, Cm)                       # im2col weight layout
    if identity_skip:
        w3s, b3s = w3, b3
    else:
        w3s = jnp.concatenate([w3, params["ws"]], axis=0)   # (Cm+Cin, Cout)
        b3s = b3 + params["bs"]

    # bf16 matmul operands (weights cast once here, activations in-kernel).
    w1m = w1.astype(mm_dtype)
    w2fm = w2f.astype(mm_dtype)
    w3sm = w3s.astype(mm_dtype)

    x = jnp.transpose(x_nchw, (0, 2, 3, 1))            # NHWC for the kernel

    full = lambda shape: pl.BlockSpec(shape, lambda n: (0,) * len(shape))

    k3 = w3s.shape[0]
    flops = int(2 * N * H * W * (Cin * Cm + 9 * Cm * Cm + k3 * Cout))
    bytes_accessed = int(4 * N * H * W * (Cin + Cout)
                         + 2 * (w1m.size + w2fm.size + w3sm.size)
                         + 4 * (b1.size + b2.size + b3s.size))

    kernel = functools.partial(_resblock_kernel,
                               identity_skip=identity_skip,
                               mm_dtype=mm_dtype)

    out = pl.pallas_call(
        kernel,
        out_shape=jax.ShapeDtypeStruct((N, H, W, Cout), jnp.float32),
        grid_spec=pltpu.PrefetchScalarGridSpec(
            num_scalar_prefetch=0,
            grid=(N,),
            in_specs=[
                pl.BlockSpec((1, H, W, Cin), lambda n: (n, 0, 0, 0)),
                full((Cin, Cm)),            # w1   (bf16)
                full((1, Cm)),              # b1   (f32)
                full((9 * Cm, Cm)),         # w2 im2col-flattened (bf16)
                full((1, Cm)),              # b2   (f32)
                full((k3, Cout)),           # [w3; ws] stacked along K (bf16)
                full((1, Cout)),            # b3 (+ bs)   (f32)
            ],
            out_specs=pl.BlockSpec((1, H, W, Cout), lambda n: (n, 0, 0, 0)),
            scratch_shapes=[pltpu.VMEM((H + 2, W + 2, Cm), jnp.float32)],
        ),
        compiler_params=pltpu.CompilerParams(
            dimension_semantics=("parallel",),
            vmem_limit_bytes=32 * 1024 * 1024),
        cost_estimate=pl.CostEstimate(flops=flops, transcendentals=0,
                                      bytes_accessed=bytes_accessed),
    )(x, w1m, b1, w2fm, b2, w3sm, b3s)

    return jnp.transpose(out, (0, 3, 1, 2))            # back to NCHW


def init_params(key, in_channels, out_channels):
    """Deterministic synthetic parameters (matmul layout: (Cin, Cout))."""
    cm = out_channels // 2
    ks = jax.random.split(key, 8)
    scale = 0.1
    p = dict(
        w1=scale * jax.random.normal(ks[0], (in_channels, cm), jnp.float32),
        b1=scale * jax.random.normal(ks[1], (1, cm), jnp.float32),
        w2=scale * jax.random.normal(ks[2], (9, cm, cm), jnp.float32),
        b2=scale * jax.random.normal(ks[3], (1, cm), jnp.float32),
        w3=scale * jax.random.normal(ks[4], (cm, out_channels), jnp.float32),
        b3=scale * jax.random.normal(ks[5], (1, out_channels), jnp.float32),
    )
    if in_channels != out_channels:
        p["ws"] = scale * jax.random.normal(ks[6], (in_channels, out_channels),
                                            jnp.float32)
        p["bs"] = scale * jax.random.normal(ks[7], (1, out_channels), jnp.float32)
    return p


def _reference_forward(x_nchw, params):
    """Pure-JAX f32 reference (NHWC convs) for validation."""
    x = jnp.transpose(x_nchw, (0, 2, 3, 1))
    dn = jax.lax.conv_dimension_numbers(x.shape, (1, 1, 1, 1),
                                        ("NHWC", "HWIO", "NHWC"))

    def conv1x1(v, w, b):
        wk = w[None, None]                              # (1,1,Cin,Cout)
        return jax.lax.conv_general_dilated(v, wk, (1, 1), "SAME",
                                            dimension_numbers=dn) + b[0]

    cm = params["w2"].shape[1]
    h = jnp.maximum(conv1x1(x, params["w1"], params["b1"]), 0.0)
    w2 = params["w2"].reshape(3, 3, cm, cm)
    h = jax.lax.conv_general_dilated(h, w2, (1, 1), "SAME",
                                     dimension_numbers=dn) + params["b2"][0]
    h = conv1x1(h, params["w3"], params["b3"])
    skip = conv1x1(x, params["ws"], params["bs"]) if "ws" in params else x
    return jnp.transpose(skip + h, (0, 3, 1, 2))


if __name__ == "__main__":
    key = jax.random.PRNGKey(0)
    k_x1, k_p1, k_x2, k_p2 = jax.random.split(key, 4)

    # Case 1: Cin != Cout -> learned 1x1 skip (fused into the final matmul).
    N, Cin, Cout, H, W = 2, 8, 16, 16, 16
    x1 = jax.random.normal(k_x1, (N, Cin, H, W), jnp.float32)
    p1 = init_params(k_p1, Cin, Cout)
    out1 = jax.block_until_ready(resblock_forward(x1, p1))
    ref1 = _reference_forward(x1, p1)
    assert out1.shape == (N, Cout, H, W)
    assert jnp.allclose(out1, ref1, atol=5e-2, rtol=5e-2), "mismatch (skip-conv case)"

    # Case 2: Cin == Cout -> identity skip (no skip matmul at all).
    Cin2 = Cout2 = 16
    x2 = jax.random.normal(k_x2, (N, Cin2, H, W), jnp.float32)
    p2 = init_params(k_p2, Cin2, Cout2)
    out2 = jax.block_until_ready(resblock_forward(x2, p2))
    ref2 = _reference_forward(x2, p2)
    assert out2.shape == (N, Cout2, H, W)
    assert jnp.allclose(out2, ref2, atol=5e-2, rtol=5e-2), "mismatch (identity-skip case)"

    print("KERNEL_OK")
</pallas_src>

<mosaic_0001>
module attributes {stable_mosaic.version = 11 : i64} {
  func.func @_resblock_kernel(%arg0: i32, %arg1: memref<1x16x16x8xf32, #tpu.memory_space<vmem>>, %arg2: memref<8x8xbf16, #tpu.memory_space<vmem>>, %arg3: memref<1x8xf32, #tpu.memory_space<vmem>>, %arg4: memref<72x8xbf16, #tpu.memory_space<vmem>>, %arg5: memref<1x8xf32, #tpu.memory_space<vmem>>, %arg6: memref<16x16xbf16, #tpu.memory_space<vmem>>, %arg7: memref<1x16xf32, #tpu.memory_space<vmem>>, %arg8: memref<1x16x16x16xf32, #tpu.memory_space<vmem>>, %arg9: memref<18x18x8xf32, #tpu.memory_space<vmem>>) attributes {dimension_semantics = [#tpu.dimension_semantics<parallel>], iteration_bounds = array<i64: 2>, scalar_prefetch = 0 : i64, scratch_operands = 1 : i64, tpu.core_type = #tpu.core_type<tc>, window_params = [{transform_indices = @transform_0, window_bounds = array<i64: 1, 16, 16, 8>}, {pipeline_mode = #tpu.pipeline_mode<synchronous>, transform_indices = @transform_1, window_bounds = array<i64: 8, 8>}, {pipeline_mode = #tpu.pipeline_mode<synchronous>, transform_indices = @transform_2, window_bounds = array<i64: 1, 8>}, {pipeline_mode = #tpu.pipeline_mode<synchronous>, transform_indices = @transform_3, window_bounds = array<i64: 72, 8>}, {pipeline_mode = #tpu.pipeline_mode<synchronous>, transform_indices = @transform_4, window_bounds = array<i64: 1, 8>}, {pipeline_mode = #tpu.pipeline_mode<synchronous>, transform_indices = @transform_5, window_bounds = array<i64: 16, 16>}, {pipeline_mode = #tpu.pipeline_mode<synchronous>, transform_indices = @transform_6, window_bounds = array<i64: 1, 16>}, {transform_indices = @transform_7, window_bounds = array<i64: 1, 16, 16, 16>}]} {
    %c0 = arith.constant 0 : index
    %c0_0 = arith.constant 0 : index
    %c0_1 = arith.constant 0 : index
    %c0_2 = arith.constant 0 : index
    %0 = vector.load %arg1[%c0, %c0_0, %c0_1, %c0_2] : memref<1x16x16x8xf32, #tpu.memory_space<vmem>>, vector<1x16x16x8xf32>
    %1 = vector.shape_cast %0 : vector<1x16x16x8xf32> to vector<16x16x8xf32>
    %2 = vector.shape_cast %1 : vector<16x16x8xf32> to vector<256x8xf32>
    %3 = arith.truncf %2 : vector<256x8xf32> to vector<256x8xbf16>
    %c0_3 = arith.constant 0 : index
    %c0_4 = arith.constant 0 : index
    %4 = vector.load %arg2[%c0_3, %c0_4] : memref<8x8xbf16, #tpu.memory_space<vmem>>, vector<8x8xbf16>
    %cst = arith.constant dense<0.000000e+00> : vector<256x8xf32>
    %5 = tpu.matmul %3, %4, %cst {dimension_numbers = #tpu.dot_dimension_numbers<[1], [0], [0], [1], [0, 0, 1, 1], [], []>} : vector<256x8xbf16>, vector<8x8xbf16>, vector<256x8xf32> -> vector<256x8xf32>
    %c0_5 = arith.constant 0 : index
    %c0_6 = arith.constant 0 : index
    %6 = vector.load %arg3[%c0_5, %c0_6] : memref<1x8xf32, #tpu.memory_space<vmem>>, vector<1x8xf32>
    %7 = vector.broadcast %6 : vector<1x8xf32> to vector<256x8xf32>
    %8 = arith.addf %5, %7 : vector<256x8xf32>
    %cst_7 = arith.constant 0.000000e+00 : f32
    %9 = vector.broadcast %cst_7 : f32 to vector<256x8xf32>
    %10 = arith.maximumf %8, %9 : vector<256x8xf32>
    %cst_8 = arith.constant 0.000000e+00 : f32
    %11 = vector.broadcast %cst_8 : f32 to vector<18x18x8xf32>
    %c0_9 = arith.constant 0 : index
    %c0_10 = arith.constant 0 : index
    %c0_11 = arith.constant 0 : index
    %12 = vector.load %arg9[%c0_9, %c0_10, %c0_11] : memref<18x18x8xf32, #tpu.memory_space<vmem>>, vector<18x18x8xf32>
    tpu.vector_store %arg9[%c0_9, %c0_10, %c0_11], %11 {strides = array<i32>} : memref<18x18x8xf32, #tpu.memory_space<vmem>>, vector<18x18x8xf32>,
    %13 = vector.shape_cast %10 : vector<256x8xf32> to vector<16x16x8xf32>
    %c1 = arith.constant 1 : index
    %c1_12 = arith.constant 1 : index
    %c0_13 = arith.constant 0 : index
    %14 = vector.load %arg9[%c1, %c1_12, %c0_13] : memref<18x18x8xf32, #tpu.memory_space<vmem>>, vector<16x16x8xf32>
    tpu.vector_store %arg9[%c1, %c1_12, %c0_13], %13 {strides = array<i32>} : memref<18x18x8xf32, #tpu.memory_space<vmem>>, vector<16x16x8xf32>,
    %c0_14 = arith.constant 0 : index
    %c0_15 = arith.constant 0 : index
    %c0_16 = arith.constant 0 : index
    %15 = vector.load %arg9[%c0_14, %c0_15, %c0_16] : memref<18x18x8xf32, #tpu.memory_space<vmem>>, vector<16x16x8xf32>
    %16 = vector.shape_cast %15 : vector<16x16x8xf32> to vector<256x8xf32>
    %c0_17 = arith.constant 0 : index
    %c1_18 = arith.constant 1 : index
    %c0_19 = arith.constant 0 : index
    %17 = vector.load %arg9[%c0_17, %c1_18, %c0_19] : memref<18x18x8xf32, #tpu.memory_space<vmem>>, vector<16x16x8xf32>
    %18 = vector.shape_cast %17 : vector<16x16x8xf32> to vector<256x8xf32>
    %c0_20 = arith.constant 0 : index
    %c2 = arith.constant 2 : index
    %c0_21 = arith.constant 0 : index
    %19 = vector.load %arg9[%c0_20, %c2, %c0_21] : memref<18x18x8xf32, #tpu.memory_space<vmem>>, vector<16x16x8xf32>
    %20 = vector.shape_cast %19 : vector<16x16x8xf32> to vector<256x8xf32>
    %c1_22 = arith.constant 1 : index
    %c0_23 = arith.constant 0 : index
    %c0_24 = arith.constant 0 : index
    %21 = vector.load %arg9[%c1_22, %c0_23, %c0_24] : memref<18x18x8xf32, #tpu.memory_space<vmem>>, vector<16x16x8xf32>
    %22 = vector.shape_cast %21 : vector<16x16x8xf32> to vector<256x8xf32>
    %c1_25 = arith.constant 1 : index
    %c1_26 = arith.constant 1 : index
    %c0_27 = arith.constant 0 : index
    %23 = vector.load %arg9[%c1_25, %c1_26, %c0_27] : memref<18x18x8xf32, #tpu.memory_space<vmem>>, vector<16x16x8xf32>
    %24 = vector.shape_cast %23 : vector<16x16x8xf32> to vector<256x8xf32>
    %c1_28 = arith.constant 1 : index
    %c2_29 = arith.constant 2 : index
    %c0_30 = arith.constant 0 : index
    %25 = vector.load %arg9[%c1_28, %c2_29, %c0_30] : memref<18x18x8xf32, #tpu.memory_space<vmem>>, vector<16x16x8xf32>
    %26 = vector.shape_cast %25 : vector<16x16x8xf32> to vector<256x8xf32>
    %c2_31 = arith.constant 2 : index
    %c0_32 = arith.constant 0 : index
    %c0_33 = arith.constant 0 : index
    %27 = vector.load %arg9[%c2_31, %c0_32, %c0_33] : memref<18x18x8xf32, #tpu.memory_space<vmem>>, vector<16x16x8xf32>
    %28 = vector.shape_cast %27 : vector<16x16x8xf32> to vector<256x8xf32>
    %c2_34 = arith.constant 2 : index
    %c1_35 = arith.constant 1 : index
    %c0_36 = arith.constant 0 : index
    %29 = vector.load %arg9[%c2_34, %c1_35, %c0_36] : memref<18x18x8xf32, #tpu.memory_space<vmem>>, vector<16x16x8xf32>
    %30 = vector.shape_cast %29 : vector<16x16x8xf32> to vector<256x8xf32>
    %c2_37 = arith.constant 2 : index
    %c2_38 = arith.constant 2 : index
    %c0_39 = arith.constant 0 : index
    %31 = vector.load %arg9[%c2_37, %c2_38, %c0_39] : memref<18x18x8xf32, #tpu.memory_space<vmem>>, vector<16x16x8xf32>
    %32 = vector.shape_cast %31 : vector<16x16x8xf32> to vector<256x8xf32>
    %33 = tpu.concatenate %16, %18, %20, %22, %24, %26, %28, %30, %32 in 1 : vector<256x8xf32>, vector<256x8xf32>, vector<256x8xf32>, vector<256x8xf32>, vector<256x8xf32>, vector<256x8xf32>, vector<256x8xf32>, vector<256x8xf32>, vector<256x8xf32> -> vector<256x72xf32>
    %34 = arith.truncf %33 : vector<256x72xf32> to vector<256x72xbf16>
    %c0_40 = arith.constant 0 : index
    %c0_41 = arith.constant 0 : index
    %35 = vector.load %arg4[%c0_40, %c0_41] : memref<72x8xbf16, #tpu.memory_space<vmem>>, vector<72x8xbf16>
    %cst_42 = arith.constant dense<0.000000e+00> : vector<256x8xf32>
    %36 = tpu.matmul %34, %35, %cst_42 {dimension_numbers = #tpu.dot_dimension_numbers<[1], [0], [0], [1], [0, 0, 1, 1], [], []>} : vector<256x72xbf16>, vector<72x8xbf16>, vector<256x8xf32> -> vector<256x8xf32>
    %c0_43 = arith.constant 0 : index
    %c0_44 = arith.constant 0 : index
    %37 = vector.load %arg5[%c0_43, %c0_44] : memref<1x8xf32, #tpu.memory_space<vmem>>, vector<1x8xf32>
    %38 = vector.broadcast %37 : vector<1x8xf32> to vector<256x8xf32>
    %39 = arith.addf %36, %38 : vector<256x8xf32>
    %40 = tpu.concatenate %39, %2 in 1 : vector<256x8xf32>, vector<256x8xf32> -> vector<256x16xf32>
    %41 = arith.truncf %40 : vector<256x16xf32> to vector<256x16xbf16>
    %c0_45 = arith.constant 0 : index
    %c0_46 = arith.constant 0 : index
    %42 = vector.load %arg6[%c0_45, %c0_46] : memref<16x16xbf16, #tpu.memory_space<vmem>>, vector<16x16xbf16>
    %cst_47 = arith.constant dense<0.000000e+00> : vector<256x16xf32>
    %43 = tpu.matmul %41, %42, %cst_47 {dimension_numbers = #tpu.dot_dimension_numbers<[1], [0], [0], [1], [0, 0, 1, 1], [], []>} : vector<256x16xbf16>, vector<16x16xbf16>, vector<256x16xf32> -> vector<256x16xf32>
    %c0_48 = arith.constant 0 : index
    %c0_49 = arith.constant 0 : index
    %44 = vector.load %arg7[%c0_48, %c0_49] : memref<1x16xf32, #tpu.memory_space<vmem>>, vector<1x16xf32>
    %45 = vector.broadcast %44 : vector<1x16xf32> to vector<256x16xf32>
    %46 = arith.addf %43, %45 : vector<256x16xf32>
    %47 = vector.shape_cast %46 : vector<256x16xf32> to vector<16x16x16xf32>
    %c0_50 = arith.constant 0 : index
    %c0_51 = arith.constant 0 : index
    %c0_52 = arith.constant 0 : index
    %c0_53 = arith.constant 0 : index
    %48 = vector.load %arg8[%c0_50, %c0_51, %c0_52, %c0_53] : memref<1x16x16x16xf32, #tpu.memory_space<vmem>>, vector<1x16x16x16xf32>
    %49 = vector.shape_cast %48 : vector<1x16x16x16xf32> to vector<16x16x16xf32>
    %50 = vector.shape_cast %47 : vector<16x16x16xf32> to vector<1x16x16x16xf32>
    tpu.vector_store %arg8[%c0_50, %c0_51, %c0_52, %c0_53], %50 {strides = array<i32>} : memref<1x16x16x16xf32, #tpu.memory_space<vmem>>, vector<1x16x16x16xf32>,
    return
  }
  func.func @transform_0(%arg0: i32) -> (i32, i32, i32, i32) {
    %c0_i32 = arith.constant 0 : i32
    %c0_i32_0 = arith.constant 0 : i32
    %c0_i32_1 = arith.constant 0 : i32
    %c0_i32_2 = arith.constant 0 : i32
    return %arg0, %c0_i32, %c0_i32_0, %c0_i32_1 : i32, i32, i32, i32
  }
  func.func @transform_1(%arg0: i32) -> (i32, i32) {
    %c0_i32 = arith.constant 0 : i32
    %c0_i32_0 = arith.constant 0 : i32
    %c0_i32_1 = arith.constant 0 : i32
    return %c0_i32, %c0_i32_0 : i32, i32
  }
  func.func @transform_2(%arg0: i32) -> (i32, i32) {
    %c0_i32 = arith.constant 0 : i32
    %c0_i32_0 = arith.constant 0 : i32
    %c0_i32_1 = arith.constant 0 : i32
    return %c0_i32, %c0_i32_0 : i32, i32
  }
  func.func @transform_3(%arg0: i32) -> (i32, i32) {
    %c0_i32 = arith.constant 0 : i32
    %c0_i32_0 = arith.constant 0 : i32
    %c0_i32_1 = arith.constant 0 : i32
    return %c0_i32, %c0_i32_0 : i32, i32
  }
  func.func @transform_4(%arg0: i32) -> (i32, i32) {
    %c0_i32 = arith.constant 0 : i32
    %c0_i32_0 = arith.constant 0 : i32
    %c0_i32_1 = arith.constant 0 : i32
    return %c0_i32, %c0_i32_0 : i32, i32
  }
  func.func @transform_5(%arg0: i32) -> (i32, i32) {
    %c0_i32 = arith.constant 0 : i32
    %c0_i32_0 = arith.constant 0 : i32
    %c0_i32_1 = arith.constant 0 : i32
    return %c0_i32, %c0_i32_0 : i32, i32
  }
  func.func @transform_6(%arg0: i32) -> (i32, i32) {
    %c0_i32 = arith.constant 0 : i32
    %c0_i32_0 = arith.constant 0 : i32
    %c0_i32_1 = arith.constant 0 : i32
    return %c0_i32, %c0_i32_0 : i32, i32
  }
  func.func @transform_7(%arg0: i32) -> (i32, i32, i32, i32) {
    %c0_i32 = arith.constant 0 : i32
    %c0_i32_0 = arith.constant 0 : i32
    %c0_i32_1 = arith.constant 0 : i32
    %c0_i32_2 = arith.constant 0 : i32
    return %arg0, %c0_i32, %c0_i32_0, %c0_i32_1 : i32, i32, i32, i32
  }
}

</mosaic_0001>

<llo_original>
// kernel: tpu_custom_call.1
$region0: #{tpu_custom_call.1}
  #allocation0 [shape = 'u32[]', space=smem, size = 0x4, offset = 0x4, fixed_abs, tag = 'smem constant byte address 0x4 - core index']
  #allocation1 [shape = 'u32[144,128]{1,0:T(1,128)}', space=vmem, size = 0x12000, scoped, tag = 'internal scratch']
  #allocation2 [shape = 'f32[18,18,8]{2,1,0:T(8,128)}', space=vmem, size = 0x36000, scoped, tag = 'scratch operand']
  %s0 = inlined_call_operand.vmem [shape: f32[2,16,16,8], index: 0, kind: input, shape index: {}]
  %s1 = inlined_call_operand.vmem [shape: bf16[8,8], index: 1, kind: input, shape index: {}]
  %s2 = inlined_call_operand.vmem [shape: f32[1,8], index: 2, kind: input, shape index: {}]
  %s3 = inlined_call_operand.vmem [shape: bf16[72,8], index: 3, kind: input, shape index: {}]
  %s4 = inlined_call_operand.vmem [shape: f32[1,8], index: 4, kind: input, shape index: {}]
  %s5 = inlined_call_operand.vmem [shape: bf16[16,16], index: 5, kind: input, shape index: {}]
  %s6 = inlined_call_operand.vmem [shape: f32[1,16], index: 6, kind: input, shape index: {}]
  %s7 = inlined_call_operand.hbm [shape: f32[2,16,16,16], index: 7, kind: output, shape index: {}]
  %s8 = sld [smem:[#allocation0]]
  $region61: #{tpu_custom_call.1} parent=0
    _
  %s10 = ssub.s32 1, %s8
  %s11 = scalar_select 0, %s10, %s8
  $region1: #{tpu_custom_call.1} parent=0
    #allocation3 [shape = 'u8[262144]{0}', space=vmem, size = 0x40000, scoped, tag = 'output window, operand 0']
    #allocation4 [shape = 's32[2]{0}', space=sflag, size = 0x8, scoped, tag = 'scoped memory for tpu_custom_call.1']
    %12 = vsyncpa [#allocation4], 0
    %s13 = scalar_lea.sflag [#allocation4], 1
    %14 = vsyncpa %s13, 0
    loop: start=0, step=1, limit=4
    $region2: #{tpu_custom_call.1} parent=1 // loop_pre_header
      _
    $region3: #{tpu_custom_call.1} parent=1 // loop_header
      %s16 = sphi 0, %s20
      %p17 = scmp.ge.s32.totalorder %s16, 4
      %s26 = sphi 0, %s28
      %s29 = sphi 0, %s26
      %s30 = sphi 0, %s29
      %s46 = sphi 0, %s30
      %s50 = sphi 0, %s50
      %s52 = sphi 0, %s50
      %s53 = sphi 0, %s52
      %s67 = sphi 0, %s53
      %s71 = sphi 0, %s71
      %s73 = sphi 0, %s71
      %s74 = sphi 0, %s73
      %s88 = sphi 0, %s74
      %s92 = sphi 0, %s92
      %s94 = sphi 0, %s92
      %s95 = sphi 0, %s94
      %s109 = sphi 0, %s95
      %s113 = sphi 0, %s113
      %s115 = sphi 0, %s113
      %s116 = sphi 0, %s115
      %s130 = sphi 0, %s116
      %s134 = sphi 0, %s134
      %s136 = sphi 0, %s134
      %s137 = sphi 0, %s136
      %s151 = sphi 0, %s137
      %s155 = sphi 0, %s155
      %s157 = sphi 0, %s155
      %s158 = sphi 0, %s157
      %s172 = sphi 0, %s158
      %s178 = sphi 0, %s180
      %s181 = sphi 0, %s178
      %s182 = sphi 0, %s181
      %s198 = sphi 0, %s182
    $region4: #{tpu_custom_call.1} parent=1 // loop_header_branch
      %19 = sbr.rel (%p17) target = $region8
    $region5: #{tpu_custom_call.1} parent=1 // loop_body
      %s21 = ssub.s32 %s16, 1
      %s22 = ssub.s32 %s16, 2
      %s23 = sadd.s32 %s16, 1
      %s24 = ssub.s32 %s16, %s23
      %p25 = scmp.eq.s32.totalorder %s24, 0
      %s27 = sadd.s32 %s26, 1
      %s28 = scalar_select %p25, %s26, %s27
      %p31 = pneg %p25
      %p32 = scmp.eq.s32.totalorder %s16, 1
      %p33 = por %p31, %p32
      %p34 = scmp.ne.s32.totalorder %s26, %s29
      %p35 = scmp.eq.s32.totalorder %s16, 0
      %p36 = por %p34, %p35
      %p37 = scmp.ne.s32.totalorder %s26, %s29
      %p38 = scmp.eq.s32.totalorder %s21, 1
      %p39 = por %p37, %p38
      %p40 = scmp.ne.s32.totalorder %s29, %s30
      %p41 = scmp.eq.s32.totalorder %s21, 0
      %p42 = por %p40, %p41
      %p43 = scmp.ne.s32.totalorder %s29, %s30
      %p44 = scmp.eq.s32.totalorder %s22, 1
      %p45 = por %p43, %p44
      %p47 = scmp.ne.s32.totalorder %s30, %s46
      %p48 = scmp.eq.s32.totalorder %s22, 0
      %p49 = por %p47, %p48
      %s51 = sadd.s32 %s50, 1
      %p54 = scmp.eq.s32.totalorder %s16, 1
      %p55 = scmp.ne.s32.totalorder %s50, %s52
      %p56 = scmp.eq.s32.totalorder %s16, 0
      %p57 = por %p55, %p56
      %p58 = scmp.ne.s32.totalorder %s50, %s52
      %p59 = scmp.eq.s32.totalorder %s21, 1
      %p60 = por %p58, %p59
      %p61 = scmp.ne.s32.totalorder %s52, %s53
      %p62 = scmp.eq.s32.totalorder %s21, 0
      %p63 = por %p61, %p62
      %p64 = scmp.ne.s32.totalorder %s52, %s53
      %p65 = scmp.eq.s32.totalorder %s22, 1
      %p66 = por %p64, %p65
      %p68 = scmp.ne.s32.totalorder %s53, %s67
      %p69 = scmp.eq.s32.totalorder %s22, 0
      %p70 = por %p68, %p69
      %s72 = sadd.s32 %s71, 1
      %p75 = scmp.eq.s32.totalorder %s16, 1
      %p76 = scmp.ne.s32.totalorder %s71, %s73
      %p77 = scmp.eq.s32.totalorder %s16, 0
      %p78 = por %p76, %p77
      %p79 = scmp.ne.s32.totalorder %s71, %s73
      %p80 = scmp.eq.s32.totalorder %s21, 1
      %p81 = por %p79, %p80
      %p82 = scmp.ne.s32.totalorder %s73, %s74
      %p83 = scmp.eq.s32.totalorder %s21, 0
      %p84 = por %p82, %p83
      %p85 = scmp.ne.s32.totalorder %s73, %s74
      %p86 = scmp.eq.s32.totalorder %s22, 1
      %p87 = por %p85, %p86
      %p89 = scmp.ne.s32.totalorder %s74, %s88
      %p90 = scmp.eq.s32.totalorder %s22, 0
      %p91 = por %p89, %p90
      %s93 = sadd.s32 %s92, 1
      %p96 = scmp.eq.s32.totalorder %s16, 1
      %p97 = scmp.ne.s32.totalorder %s92, %s94
      %p98 = scmp.eq.s32.totalorder %s16, 0
      %p99 = por %p97, %p98
      %p100 = scmp.ne.s32.totalorder %s92, %s94
      %p101 = scmp.eq.s32.totalorder %s21, 1
      %p102 = por %p100, %p101
      %p103 = scmp.ne.s32.totalorder %s94, %s95
      %p104 = scmp.eq.s32.totalorder %s21, 0
      %p105 = por %p103, %p104
      %p106 = scmp.ne.s32.totalorder %s94, %s95
      %p107 = scmp.eq.s32.totalorder %s22, 1
      %p108 = por %p106, %p107
      %p110 = scmp.ne.s32.totalorder %s95, %s109
      %p111 = scmp.eq.s32.totalorder %s22, 0
      %p112 = por %p110, %p111
      %s114 = sadd.s32 %s113, 1
      %p117 = scmp.eq.s32.totalorder %s16, 1
      %p118 = scmp.ne.s32.totalorder %s113, %s115
      %p119 = scmp.eq.s32.totalorder %s16, 0
      %p120 = por %p118, %p119
      %p121 = scmp.ne.s32.totalorder %s113, %s115
      %p122 = scmp.eq.s32.totalorder %s21, 1
      %p123 = por %p121, %p122
      %p124 = scmp.ne.s32.totalorder %s115, %s116
      %p125 = scmp.eq.s32.totalorder %s21, 0
      %p126 = por %p124, %p125
      %p127 = scmp.ne.s32.totalorder %s115, %s116
      %p128 = scmp.eq.s32.totalorder %s22, 1
      %p129 = por %p127, %p128
      %p131 = scmp.ne.s32.totalorder %s116, %s130
      %p132 = scmp.eq.s32.totalorder %s22, 0
      %p133 = por %p131, %p132
      %s135 = sadd.s32 %s134, 1
      %p138 = scmp.eq.s32.totalorder %s16, 1
      %p139 = scmp.ne.s32.totalorder %s134, %s136
      %p140 = scmp.eq.s32.totalorder %s16, 0
      %p141 = por %p139, %p140
      %p142 = scmp.ne.s32.totalorder %s134, %s136
      %p143 = scmp.eq.s32.totalorder %s21, 1
      %p144 = por %p142, %p143
      %p145 = scmp.ne.s32.totalorder %s136, %s137
      %p146 = scmp.eq.s32.totalorder %s21, 0
      %p147 = por %p145, %p146
      %p148 = scmp.ne.s32.totalorder %s136, %s137
      %p149 = scmp.eq.s32.totalorder %s22, 1
      %p150 = por %p148, %p149
      %p152 = scmp.ne.s32.totalorder %s137, %s151
      %p153 = scmp.eq.s32.totalorder %s22, 0
      %p154 = por %p152, %p153
      %s156 = sadd.s32 %s155, 1
      %p159 = scmp.eq.s32.totalorder %s16, 1
      %p160 = scmp.ne.s32.totalorder %s155, %s157
      %p161 = scmp.eq.s32.totalorder %s16, 0
      %p162 = por %p160, %p161
      %p163 = scmp.ne.s32.totalorder %s155, %s157
      %p164 = scmp.eq.s32.totalorder %s21, 1
      %p165 = por %p163, %p164
      %p166 = scmp.ne.s32.totalorder %s157, %s158
      %p167 = scmp.eq.s32.totalorder %s21, 0
      %p168 = por %p166, %p167
      %p169 = scmp.ne.s32.totalorder %s157, %s158
      %p170 = scmp.eq.s32.totalorder %s22, 1
      %p171 = por %p169, %p170
      %p173 = scmp.ne.s32.totalorder %s158, %s172
      %p174 = scmp.eq.s32.totalorder %s22, 0
      %p175 = por %p173, %p174
      %s176 = ssub.s32 %s16, %s23
      %p177 = scmp.eq.s32.totalorder %s176, 0
      %s179 = sadd.s32 %s178, 1
      %s180 = scalar_select %p177, %s178, %s179
      %p183 = pneg %p177
      %p184 = scmp.eq.s32.totalorder %s16, 1
      %p185 = por %p183, %p184
      %p186 = scmp.ne.s32.totalorder %s178, %s181
      %p187 = scmp.eq.s32.totalorder %s16, 0
      %p188 = por %p186, %p187
      %p189 = scmp.ne.s32.totalorder %s178, %s181
      %p190 = scmp.eq.s32.totalorder %s21, 1
      %p191 = por %p189, %p190
      %p192 = scmp.ne.s32.totalorder %s181, %s182
      %p193 = scmp.eq.s32.totalorder %s21, 0
      %p194 = por %p192, %p193
      %p195 = scmp.ne.s32.totalorder %s181, %s182
      %p196 = scmp.eq.s32.totalorder %s22, 1
      %p197 = por %p195, %p196
      %p199 = scmp.ne.s32.totalorder %s182, %s198
      %p200 = scmp.eq.s32.totalorder %s22, 0
      %p201 = por %p199, %p200
      %p202 = scmp.le.s32.totalorder 1, %s16
      %p203 = scmp.lt.s32.totalorder %s16, 3
      %p204 = pnand %p202, %p203
      %p205 = pneg %p204
      // Predicated region
      $region9: #{tpu_custom_call.1} parent=5 // pred_check
        _
      $region10: #{tpu_custom_call.1} parent=5 // pred_check_branch
        %207 = sbr.rel (%p204) target = $region12
      $region11: #{tpu_custom_call.1} parent=5 // pred_region
        %s208 = ssub.s32 %s16, 1
        // Predicated region
        $region13: #{tpu_custom_call.1} parent=11 // pred_check
          %p209 = pneg %p63
        $region14: #{tpu_custom_call.1} parent=11 // pred_check_branch
          %211 = sbr.rel (%p209) target = $region16
        $region15: #{tpu_custom_call.1} parent=11 // pred_region
          _
        $region16: #{tpu_custom_call.1} parent=11 // pred_fallthru
          _
        // Predicated region
        $region17: #{tpu_custom_call.1} parent=11 // pred_check
          %p212 = pneg %p84
        $region18: #{tpu_custom_call.1} parent=11 // pred_check_branch
          %214 = sbr.rel (%p212) target = $region20
        $region19: #{tpu_custom_call.1} parent=11 // pred_region
          _
        $region20: #{tpu_custom_call.1} parent=11 // pred_fallthru
          _
        // Predicated region
        $region21: #{tpu_custom_call.1} parent=11 // pred_check
          %p215 = pneg %p105
        $region22: #{tpu_custom_call.1} parent=11 // pred_check_branch
          %217 = sbr.rel (%p215) target = $region24
        $region23: #{tpu_custom_call.1} parent=11 // pred_region
          _
        $region24: #{tpu_custom_call.1} parent=11 // pred_fallthru
          _
        // Predicated region
        $region25: #{tpu_custom_call.1} parent=11 // pred_check
          %p218 = pneg %p126
        $region26: #{tpu_custom_call.1} parent=11 // pred_check_branch
          %220 = sbr.rel (%p218) target = $region28
        $region27: #{tpu_custom_call.1} parent=11 // pred_region
          _
        $region28: #{tpu_custom_call.1} parent=11 // pred_fallthru
          _
        // Predicated region
        $region29: #{tpu_custom_call.1} parent=11 // pred_check
          %p221 = pneg %p147
        $region30: #{tpu_custom_call.1} parent=11 // pred_check_branch
          %223 = sbr.rel (%p221) target = $region32
        $region31: #{tpu_custom_call.1} parent=11 // pred_region
          _
        $region32: #{tpu_custom_call.1} parent=11 // pred_fallthru
          _
        // Predicated region
        $region33: #{tpu_custom_call.1} parent=11 // pred_check
          %p224 = pneg %p168
        $region34: #{tpu_custom_call.1} parent=11 // pred_check_branch
          %226 = sbr.rel (%p224) target = $region36
        $region35: #{tpu_custom_call.1} parent=11 // pred_region
          _
        $region36: #{tpu_custom_call.1} parent=11 // pred_fallthru
          _
      $region12: #{tpu_custom_call.1} parent=5 // pred_fallthru
        _
      %p227 = scmp.lt.s32.totalorder %s16, 2
      // Predicated region
      $region37: #{tpu_custom_call.1} parent=5 // pred_check
        %p228 = pneg %p227
      $region38: #{tpu_custom_call.1} parent=5 // pred_check_branch
        %230 = sbr.rel (%p228) target = $region40
      $region39: #{tpu_custom_call.1} parent=5 // pred_region
        // Predicated region
        $region41: #{tpu_custom_call.1} parent=39 // pred_check
          %p231 = pneg %p36
        $region42: #{tpu_custom_call.1} parent=39 // pred_check_branch
          %233 = sbr.rel (%p231) target = $region44
        $region43: #{tpu_custom_call.1} parent=39 // pred_region
          %p234 = scmp.lt.s32.totalorder %s16, 1
          %s235 = scalar_select %p234, %s16, 1
          %s236 = smul.addr %s235, 32
          %s237 = smul.addr %s236, 8
          %s238 = scalar_lea.vmem %s0, %s237
        $region44: #{tpu_custom_call.1} parent=39 // pred_fallthru
          _
      $region40: #{tpu_custom_call.1} parent=5 // pred_fallthru
        _
      %p239 = scmp.le.s32.totalorder 1, %s16
      %p240 = scmp.lt.s32.totalorder %s16, 3
      %p241 = pnand %p239, %p240
      %p242 = pneg %p241
      // Predicated region
      $region45: #{tpu_custom_call.1} parent=5 // pred_check
        _
      $region46: #{tpu_custom_call.1} parent=5 // pred_check_branch
        %244 = sbr.rel (%p241) target = $region48
      $region47: #{tpu_custom_call.1} parent=5 // pred_region
        %s245 = ssub.s32 %s16, 1
        %p246 = scmp.lt.s32.totalorder %s21, 1
        %s247 = scalar_select %p246, %s21, 1
        %s248 = smul.addr %s247, 32
        %s249 = smul.addr %s248, 8
        %s250 = scalar_lea.vmem %s0, %s249
        %p251 = pneg %p42
        %p252 = pneg %p39
        %p253 = pneg %p63
        %p254 = pneg %p60
        %p255 = pneg %p84
        %p256 = pneg %p81
        %p257 = pneg %p105
        %p258 = pneg %p102
        %p259 = pneg %p126
        %p260 = pneg %p123
        %p261 = pneg %p147
        %p262 = pneg %p144
        %p263 = pneg %p168
        %p264 = pneg %p165
        %p265 = pneg %p194
        %p266 = pneg %p191
        %s267 = sand.u32 %s181, 1
        %s268 = scalar_lea.sflag [#allocation4], %s267
        %s269 = sand.u32 %s181, 1
        %s270 = smul.addr %s269, 256
        %s271 = scalar_lea.vmem [#allocation3], %s270
        %p272 = scmp.lt.s32.totalorder %s21, 1
        %s273 = scalar_select %p272, %s21, 1
        %s274 = smul.addr %s273, 32
        %s275 = smul.addr %s274, 8
        %s276 = scalar_lea.vmem %s0, %s275
        %v278 = vld [vmem:[%s276] sm:$0xff]
        %v279 = vld [vmem:[%s276 + $0x8] sm:$0xff]
        %v280 = vld [vmem:[%s276 + $0x10] sm:$0xff]
        %v281 = vld [vmem:[%s276 + $0x18] sm:$0xff]
        %v282 = vld [vmem:[%s276 + $0x20] sm:$0xff]
        %v283 = vld [vmem:[%s276 + $0x28] sm:$0xff]
        %v284 = vld [vmem:[%s276 + $0x30] sm:$0xff]
        %v285 = vld [vmem:[%s276 + $0x38] sm:$0xff]
        %v286 = vld [vmem:[%s276 + $0x40] sm:$0xff]
        %v287 = vld [vmem:[%s276 + $0x48] sm:$0xff]
        %v288 = vld [vmem:[%s276 + $0x50] sm:$0xff]
        %v289 = vld [vmem:[%s276 + $0x58] sm:$0xff]
        %v290 = vld [vmem:[%s276 + $0x60] sm:$0xff]
        %v291 = vld [vmem:[%s276 + $0x68] sm:$0xff]
        %v292 = vld [vmem:[%s276 + $0x70] sm:$0xff]
        %v293 = vld [vmem:[%s276 + $0x78] sm:$0xff]
        %v294 = vld [vmem:[%s276 + $0x80] sm:$0xff]
        %v295 = vld [vmem:[%s276 + $0x88] sm:$0xff]
        %v296 = vld [vmem:[%s276 + $0x90] sm:$0xff]
        %v297 = vld [vmem:[%s276 + $0x98] sm:$0xff]
        %v298 = vld [vmem:[%s276 + $0xa0] sm:$0xff]
        %v299 = vld [vmem:[%s276 + $0xa8] sm:$0xff]
        %v300 = vld [vmem:[%s276 + $0xb0] sm:$0xff]
        %v301 = vld [vmem:[%s276 + $0xb8] sm:$0xff]
        %v302 = vld [vmem:[%s276 + $0xc0] sm:$0xff]
        %v303 = vld [vmem:[%s276 + $0xc8] sm:$0xff]
        %v304 = vld [vmem:[%s276 + $0xd0] sm:$0xff]
        %v305 = vld [vmem:[%s276 + $0xd8] sm:$0xff]
        %v306 = vld [vmem:[%s276 + $0xe0] sm:$0xff]
        %v307 = vld [vmem:[%s276 + $0xe8] sm:$0xff]
        %v308 = vld [vmem:[%s276 + $0xf0] sm:$0xff]
        %v309 = vld [vmem:[%s276 + $0xf8] sm:$0xff]
        %v310 = vpack.c.bf16 %v279, %v278
        %v311 = vpack.c.bf16 %v281, %v280
        %v312 = vpack.c.bf16 %v283, %v282
        %v313 = vpack.c.bf16 %v285, %v284
        %v314 = vpack.c.bf16 %v287, %v286
        %v315 = vpack.c.bf16 %v289, %v288
        %v316 = vpack.c.bf16 %v291, %v290
        %v317 = vpack.c.bf16 %v293, %v292
        %v318 = vpack.c.bf16 %v295, %v294
        %v319 = vpack.c.bf16 %v297, %v296
        %v320 = vpack.c.bf16 %v299, %v298
        %v321 = vpack.c.bf16 %v301, %v300
        %v322 = vpack.c.bf16 %v303, %v302
        %v323 = vpack.c.bf16 %v305, %v304
        %v324 = vpack.c.bf16 %v307, %v306
        %v325 = vpack.c.bf16 %v309, %v308
        %v326 = vld [vmem:[%s1] sm:$0xf]
        %v327 = vld [vmem:[%s2] sm:$0x1]
        %v329 = vlaneseq
        %v330 = vshrl.u32 %v329, 7
        %v331 = vsub.s32 0, %v330
        %v332 = vrot.slane %v327, %v331
        %vm334 = vcmask 64512
        %v336 = vsel %vm334, %v310, 0
        %v339 = vsel %vm334, %v311, 0
        %v342 = vsel %vm334, %v312, 0
        %v345 = vsel %vm334, %v313, 0
        %v348 = vsel %vm334, %v314, 0
        %v351 = vsel %vm334, %v315, 0
        %v354 = vsel %vm334, %v316, 0
        %v357 = vsel %vm334, %v317, 0
        %v360 = vsel %vm334, %v318, 0
        %v363 = vsel %vm334, %v319, 0
        %v366 = vsel %vm334, %v320, 0
        %v369 = vsel %vm334, %v321, 0
        %v372 = vsel %vm334, %v322, 0
        %v375 = vsel %vm334, %v323, 0
        %v378 = vsel %vm334, %v324, 0
        %v381 = vsel %vm334, %v325, 0
        %vm383 = vcmask 1043456
        %v385 = vsel %vm383, %v326, 0
        %387 = vmatprep.subr.bf16.mxu0 0
        %388 = vmatpush1.bf16.msra.mxu0 %v385
        %389 = vmatprep.subr.bf16.mxu0 0
        %390 = vmatpush1.bf16.msra.mxu0 0
        %391 = vmatprep.subr.bf16.mxu0 0
        %392 = vmatpush1.bf16.msra.mxu0 0
        %393 = vmatprep.subr.bf16.mxu0 0
        %394 = vmatpush1.bf16.msra.mxu0 0
        %395 = vmatprep.subr.bf16.mxu0 0
        %396 = vmatpush1.bf16.msra.mxu0 0
        %397 = vmatprep.subr.bf16.mxu0 0
        %398 = vmatpush1.bf16.msra.mxu0 0
        %399 = vmatprep.subr.bf16.mxu0 0
        %400 = vmatpush1.bf16.msra.mxu0 0
        %401 = vmatprep.subr.bf16.mxu0 0
        %402 = vmatpush1.bf16.msra.mxu0 0
        %403 = vmatprep.subr.bf16.mxu0 0
        %404 = vmatpush1.bf16.msra.mxu0 0
        %405 = vmatprep.subr.bf16.mxu0 0
        %406 = vmatpush1.bf16.msra.mxu0 0
        %407 = vmatprep.subr.bf16.mxu0 0
        %408 = vmatpush1.bf16.msra.mxu0 0
        %409 = vmatprep.subr.bf16.mxu0 0
        %410 = vmatpush1.bf16.msra.mxu0 0
        %411 = vmatprep.subr.bf16.mxu0 0
        %412 = vmatpush1.bf16.msra.mxu0 0
        %413 = vmatprep.subr.bf16.mxu0 0
        %414 = vmatpush1.bf16.msra.mxu0 0
        %415 = vmatprep.subr.bf16.mxu0 0
        %416 = vmatpush1.bf16.msra.mxu0 0
        %417 = vmatprep.subr.bf16.mxu0 0
        %418 = vmatpush1.bf16.msra.mxu0 0
        %419 = vmatprep.mubr.bf16.mxu0 0
        %420 = vmatmul.mubr.bf16.gmra.mrb[0].mxu0 %v336
        %v421 = vpop.f32.mrb[0].mxu0
        %v422 = vadd.f32 %v332, %v421
        %v423 = vpop.f32.mrb[0].mxu0
        %v424 = vpop.f32.mrb[0].mxu0
        %v425 = vadd.f32 %v332, %v424
        %v426 = vpop.f32.mrb[0].mxu0
        %427 = vmatprep.mubr.bf16.mxu0 0
        %428 = vmatmul.mubr.bf16.gmra.mrb[0].mxu0 %v339
        %v429 = vpop.f32.mrb[0].mxu0
        %v430 = vadd.f32 %v332, %v429
        %v431 = vpop.f32.mrb[0].mxu0
        %v432 = vpop.f32.mrb[0].mxu0
        %v433 = vadd.f32 %v332, %v432
        %v434 = vpop.f32.mrb[0].mxu0
        %435 = vmatprep.mubr.bf16.mxu0 0
        %436 = vmatmul.mubr.bf16.gmra.mrb[0].mxu0 %v342
        %v437 = vpop.f32.mrb[0].mxu0
        %v438 = vadd.f32 %v332, %v437
        %v439 = vpop.f32.mrb[0].mxu0
        %v440 = vpop.f32.mrb[0].mxu0
        %v441 = vadd.f32 %v332, %v440
        %v442 = vpop.f32.mrb[0].mxu0
        %443 = vmatprep.mubr.bf16.mxu0 0
        %444 = vmatmul.mubr.bf16.gmra.mrb[0].mxu0 %v345
        %v445 = vpop.f32.mrb[0].mxu0
        %v446 = vadd.f32 %v332, %v445
        %v447 = vpop.f32.mrb[0].mxu0
        %v448 = vpop.f32.mrb[0].mxu0
        %v449 = vadd.f32 %v332, %v448
        %v450 = vpop.f32.mrb[0].mxu0
        %451 = vmatprep.mubr.bf16.mxu0 0
        %452 = vmatmul.mubr.bf16.gmra.mrb[0].mxu0 %v348
        %v453 = vpop.f32.mrb[0].mxu0
        %v454 = vadd.f32 %v332, %v453
        %v455 = vpop.f32.mrb[0].mxu0
        %v456 = vpop.f32.mrb[0].mxu0
        %v457 = vadd.f32 %v332, %v456
        %v458 = vpop.f32.mrb[0].mxu0
        %459 = vmatprep.mubr.bf16.mxu0 0
        %460 = vmatmul.mubr.bf16.gmra.mrb[0].mxu0 %v351
        %v461 = vpop.f32.mrb[0].mxu0
        %v462 = vadd.f32 %v332, %v461
        %v463 = vpop.f32.mrb[0].mxu0
        %v464 = vpop.f32.mrb[0].mxu0
        %v465 = vadd.f32 %v332, %v464
        %v466 = vpop.f32.mrb[0].mxu0
        %467 = vmatprep.mubr.bf16.mxu0 0
        %468 = vmatmul.mubr.bf16.gmra.mrb[0].mxu0 %v354
        %v469 = vpop.f32.mrb[0].mxu0
        %v470 = vadd.f32 %v332, %v469
        %v471 = vpop.f32.mrb[0].mxu0
        %v472 = vpop.f32.mrb[0].mxu0
        %v473 = vadd.f32 %v332, %v472
        %v474 = vpop.f32.mrb[0].mxu0
        %475 = vmatprep.mubr.bf16.mxu0 0
        %476 = vmatmul.mubr.bf16.gmra.mrb[0].mxu0 %v357
        %v477 = vpop.f32.mrb[0].mxu0
        %v478 = vadd.f32 %v332, %v477
        %v479 = vpop.f32.mrb[0].mxu0
        %v480 = vpop.f32.mrb[0].mxu0
        %v481 = vadd.f32 %v332, %v480
        %v482 = vpop.f32.mrb[0].mxu0
        %483 = vmatprep.mubr.bf16.mxu0 0
        %484 = vmatmul.mubr.bf16.gmra.mrb[0].mxu0 %v360
        %v485 = vpop.f32.mrb[0].mxu0
        %v486 = vadd.f32 %v332, %v485
        %v487 = vpop.f32.mrb[0].mxu0
        %v488 = vpop.f32.mrb[0].mxu0
        %v489 = vadd.f32 %v332, %v488
        %v490 = vpop.f32.mrb[0].mxu0
        %491 = vmatprep.mubr.bf16.mxu0 0
        %492 = vmatmul.mubr.bf16.gmra.mrb[0].mxu0 %v363
        %v493 = vpop.f32.mrb[0].mxu0
        %v494 = vadd.f32 %v332, %v493
        %v495 = vpop.f32.mrb[0].mxu0
        %v496 = vpop.f32.mrb[0].mxu0
        %v497 = vadd.f32 %v332, %v496
        %v498 = vpop.f32.mrb[0].mxu0
        %499 = vmatprep.mubr.bf16.mxu0 0
        %500 = vmatmul.mubr.bf16.gmra.mrb[0].mxu0 %v366
        %v501 = vpop.f32.mrb[0].mxu0
        %v502 = vadd.f32 %v332, %v501
        %v503 = vpop.f32.mrb[0].mxu0
        %v504 = vpop.f32.mrb[0].mxu0
        %v505 = vadd.f32 %v332, %v504
        %v506 = vpop.f32.mrb[0].mxu0
        %507 = vmatprep.mubr.bf16.mxu0 0
        %508 = vmatmul.mubr.bf16.gmra.mrb[0].mxu0 %v369
        %v509 = vpop.f32.mrb[0].mxu0
        %v510 = vadd.f32 %v332, %v509
        %v511 = vpop.f32.mrb[0].mxu0
        %v512 = vpop.f32.mrb[0].mxu0
        %v513 = vadd.f32 %v332, %v512
        %v514 = vpop.f32.mrb[0].mxu0
        %515 = vmatprep.mubr.bf16.mxu0 0
        %516 = vmatmul.mubr.bf16.gmra.mrb[0].mxu0 %v372
        %v517 = vpop.f32.mrb[0].mxu0
        %v518 = vadd.f32 %v332, %v517
        %v519 = vpop.f32.mrb[0].mxu0
        %v520 = vpop.f32.mrb[0].mxu0
        %v521 = vadd.f32 %v332, %v520
        %v522 = vpop.f32.mrb[0].mxu0
        %523 = vmatprep.mubr.bf16.mxu0 0
        %524 = vmatmul.mubr.bf16.gmra.mrb[0].mxu0 %v375
        %v525 = vpop.f32.mrb[0].mxu0
        %v526 = vadd.f32 %v332, %v525
        %v527 = vpop.f32.mrb[0].mxu0
        %v528 = vpop.f32.mrb[0].mxu0
        %v529 = vadd.f32 %v332, %v528
        %v530 = vpop.f32.mrb[0].mxu0
        %531 = vmatprep.mubr.bf16.mxu0 0
        %532 = vmatmul.mubr.bf16.gmra.mrb[0].mxu0 %v378
        %v533 = vpop.f32.mrb[0].mxu0
        %v534 = vadd.f32 %v332, %v533
        %v535 = vpop.f32.mrb[0].mxu0
        %v536 = vpop.f32.mrb[0].mxu0
        %v537 = vadd.f32 %v332, %v536
        %v538 = vpop.f32.mrb[0].mxu0
        %539 = vmatprep.mubr.bf16.mxu0 0
        %540 = vmatmul.mubr.bf16.gmra.mrb[0].mxu0 %v381
        %v541 = vpop.f32.mrb[0].mxu0
        %v542 = vadd.f32 %v332, %v541
        %v543 = vpop.f32.mrb[0].mxu0
        %v544 = vpop.f32.mrb[0].mxu0
        %v545 = vadd.f32 %v332, %v544
        %v546 = vpop.f32.mrb[0].mxu0
        %547 = vdwg.mxu0
        %v548 = vmax.f32 %v422, 0.0
        %v549 = vmax.f32 %v425, 0.0
        %v550 = vmax.f32 %v430, 0.0
        %v551 = vmax.f32 %v433, 0.0
        %v552 = vmax.f32 %v438, 0.0
        %v553 = vmax.f32 %v441, 0.0
        %v554 = vmax.f32 %v446, 0.0
        %v555 = vmax.f32 %v449, 0.0
        %v556 = vmax.f32 %v454, 0.0
        %v557 = vmax.f32 %v457, 0.0
        %v558 = vmax.f32 %v462, 0.0
        %v559 = vmax.f32 %v465, 0.0
        %v560 = vmax.f32 %v470, 0.0
        %v561 = vmax.f32 %v473, 0.0
        %v562 = vmax.f32 %v478, 0.0
        %v563 = vmax.f32 %v481, 0.0
        %v564 = vmax.f32 %v486, 0.0
        %v565 = vmax.f32 %v489, 0.0
        %v566 = vmax.f32 %v494, 0.0
        %v567 = vmax.f32 %v497, 0.0
        %v568 = vmax.f32 %v502, 0.0
        %v569 = vmax.f32 %v505, 0.0
        %v570 = vmax.f32 %v510, 0.0
        %v571 = vmax.f32 %v513, 0.0
        %v572 = vmax.f32 %v518, 0.0
        %v573 = vmax.f32 %v521, 0.0
        %v574 = vmax.f32 %v526, 0.0
        %v575 = vmax.f32 %v529, 0.0
        %v576 = vmax.f32 %v534, 0.0
        %v577 = vmax.f32 %v537, 0.0
        %v578 = vmax.f32 %v542, 0.0
        %v579 = vmax.f32 %v545, 0.0
        %580 = vst.msk [vmem:[#allocation2] sm:$0xff] %vm334, 0.0
        %581 = vst.msk [vmem:[#allocation2 + $0x8] sm:$0xff] %vm334, 0.0
        %vm582 = vcmask 58368
        %583 = vst.msk [vmem:[#allocation2 + $0x10] sm:$0x3] %vm582, 0.0
        %584 = vst.msk [vmem:[#allocation2 + $0x18] sm:$0xff] %vm334, 0.0
        %585 = vst.msk [vmem:[#allocation2 + $0x20] sm:$0xff] %vm334, 0.0
        %586 = vst.msk [vmem:[#allocation2 + $0x28] sm:$0x3] %vm582, 0.0
        %587 = vst.msk [vmem:[#allocation2 + $0x30] sm:$0xff] %vm334, 0.0
        %588 = vst.msk [vmem:[#allocation2 + $0x38] sm:$0xff] %vm334, 0.0
        %589 = vst.msk [vmem:[#allocation2 + $0x40] sm:$0x3] %vm582, 0.0
        %590 = vst.msk [vmem:[#allocation2 + $0x48] sm:$0xff] %vm334, 0.0
        %591 = vst.msk [vmem:[#allocation2 + $0x50] sm:$0xff] %vm334, 0.0
        %592 = vst.msk [vmem:[#allocation2 + $0x58] sm:$0x3] %vm582, 0.0
        %593 = vst.msk [vmem:[#allocation2 + $0x60] sm:$0xff] %vm334, 0.0
        %594 = vst.msk [vmem:[#allocation2 + $0x68] sm:$0xff] %vm334, 0.0
        %595 = vst.msk [vmem:[#allocation2 + $0x70] sm:$0x3] %vm582, 0.0
        %596 = vst.msk [vmem:[#allocation2 + $0x78] sm:$0xff] %vm334, 0.0
        %597 = vst.msk [vmem:[#allocation2 + $0x80] sm:$0xff] %vm334, 0.0
        %598 = vst.msk [vmem:[#allocation2 + $0x88] sm:$0x3] %vm582, 0.0
        %599 = vst.msk [vmem:[#allocation2 + $0x90] sm:$0xff] %vm334, 0.0
        %600 = vst.msk [vmem:[#allocation2 + $0x98] sm:$0xff] %vm334, 0.0
        %601 = vst.msk [vmem:[#allocation2 + $0xa0] sm:$0x3] %vm582, 0.0
        %602 = vst.msk [vmem:[#allocation2 + $0xa8] sm:$0xff] %vm334, 0.0
        %603 = vst.msk [vmem:[#allocation2 + $0xb0] sm:$0xff] %vm334, 0.0
        %604 = vst.msk [vmem:[#allocation2 + $0xb8] sm:$0x3] %vm582, 0.0
        %605 = vst.msk [vmem:[#allocation2 + $0xc0] sm:$0xff] %vm334, 0.0
        %606 = vst.msk [vmem:[#allocation2 + $0xc8] sm:$0xff] %vm334, 0.0
        %607 = vst.msk [vmem:[#allocation2 + $0xd0] sm:$0x3] %vm582, 0.0
        %608 = vst.msk [vmem:[#allocation2 + $0xd8] sm:$0xff] %vm334, 0.0
        %609 = vst.msk [vmem:[#allocation2 + $0xe0] sm:$0xff] %vm334, 0.0
        %610 = vst.msk [vmem:[#allocation2 + $0xe8] sm:$0x3] %vm582, 0.0
        %611 = vst.msk [vmem:[#allocation2 + $0xf0] sm:$0xff] %vm334, 0.0
        %612 = vst.msk [vmem:[#allocation2 + $0xf8] sm:$0xff] %vm334, 0.0
        %613 = vst.msk [vmem:[#allocation2 + $0x100] sm:$0x3] %vm582, 0.0
        %614 = vst.msk [vmem:[#allocation2 + $0x108] sm:$0xff] %vm334, 0.0
        %615 = vst.msk [vmem:[#allocation2 + $0x110] sm:$0xff] %vm334, 0.0
        %616 = vst.msk [vmem:[#allocation2 + $0x118] sm:$0x3] %vm582, 0.0
        %617 = vst.msk [vmem:[#allocation2 + $0x120] sm:$0xff] %vm334, 0.0
        %618 = vst.msk [vmem:[#allocation2 + $0x128] sm:$0xff] %vm334, 0.0
        %619 = vst.msk [vmem:[#allocation2 + $0x130] sm:$0x3] %vm582, 0.0
        %620 = vst.msk [vmem:[#allocation2 + $0x138] sm:$0xff] %vm334, 0.0
        %621 = vst.msk [vmem:[#allocation2 + $0x140] sm:$0xff] %vm334, 0.0
        %622 = vst.msk [vmem:[#allocation2 + $0x148] sm:$0x3] %vm582, 0.0
        %623 = vst.msk [vmem:[#allocation2 + $0x150] sm:$0xff] %vm334, 0.0
        %624 = vst.msk [vmem:[#allocation2 + $0x158] sm:$0xff] %vm334, 0.0
        %625 = vst.msk [vmem:[#allocation2 + $0x160] sm:$0x3] %vm582, 0.0
        %626 = vst.msk [vmem:[#allocation2 + $0x168] sm:$0xff] %vm334, 0.0
        %627 = vst.msk [vmem:[#allocation2 + $0x170] sm:$0xff] %vm334, 0.0
        %628 = vst.msk [vmem:[#allocation2 + $0x178] sm:$0x3] %vm582, 0.0
        %629 = vst.msk [vmem:[#allocation2 + $0x180] sm:$0xff] %vm334, 0.0
        %630 = vst.msk [vmem:[#allocation2 + $0x188] sm:$0xff] %vm334, 0.0
        %631 = vst.msk [vmem:[#allocation2 + $0x190] sm:$0x3] %vm582, 0.0
        %632 = vst.msk [vmem:[#allocation2 + $0x198] sm:$0xff] %vm334, 0.0
        %633 = vst.msk [vmem:[#allocation2 + $0x1a0] sm:$0xff] %vm334, 0.0
        %634 = vst.msk [vmem:[#allocation2 + $0x1a8] sm:$0x3] %vm582, 0.0
        %s635 = scalar_lea.vmem [#allocation2], 24
        %636 = vst.msk [vmem:[%s635 + $0x1] sm:$0xff] %vm334, %v548
        %637 = vst.msk [vmem:[%s635 + $0x9] sm:$0xff] %vm334, %v549
        %638 = vst.msk [vmem:[%s635 + $0x19] sm:$0xff] %vm334, %v550
        %639 = vst.msk [vmem:[%s635 + $0x21] sm:$0xff] %vm334, %v551
        %640 = vst.msk [vmem:[%s635 + $0x31] sm:$0xff] %vm334, %v552
        %641 = vst.msk [vmem:[%s635 + $0x39] sm:$0xff] %vm334, %v553
        %642 = vst.msk [vmem:[%s635 + $0x49] sm:$0xff] %vm334, %v554
        %643 = vst.msk [vmem:[%s635 + $0x51] sm:$0xff] %vm334, %v555
        %644 = vst.msk [vmem:[%s635 + $0x61] sm:$0xff] %vm334, %v556
        %645 = vst.msk [vmem:[%s635 + $0x69] sm:$0xff] %vm334, %v557
        %646 = vst.msk [vmem:[%s635 + $0x79] sm:$0xff] %vm334, %v558
        %647 = vst.msk [vmem:[%s635 + $0x81] sm:$0xff] %vm334, %v559
        %648 = vst.msk [vmem:[%s635 + $0x91] sm:$0xff] %vm334, %v560
        %649 = vst.msk [vmem:[%s635 + $0x99] sm:$0xff] %vm334, %v561
        %650 = vst.msk [vmem:[%s635 + $0xa9] sm:$0xff] %vm334, %v562
        %651 = vst.msk [vmem:[%s635 + $0xb1] sm:$0xff] %vm334, %v563
        %652 = vst.msk [vmem:[%s635 + $0xc1] sm:$0xff] %vm334, %v564
        %653 = vst.msk [vmem:[%s635 + $0xc9] sm:$0xff] %vm334, %v565
        %654 = vst.msk [vmem:[%s635 + $0xd9] sm:$0xff] %vm334, %v566
        %655 = vst.msk [vmem:[%s635 + $0xe1] sm:$0xff] %vm334, %v567
        %656 = vst.msk [vmem:[%s635 + $0xf1] sm:$0xff] %vm334, %v568
        %657 = vst.msk [vmem:[%s635 + $0xf9] sm:$0xff] %vm334, %v569
        %658 = vst.msk [vmem:[%s635 + $0x109] sm:$0xff] %vm334, %v570
        %659 = vst.msk [vmem:[%s635 + $0x111] sm:$0xff] %vm334, %v571
        %660 = vst.msk [vmem:[%s635 + $0x121] sm:$0xff] %vm334, %v572
        %661 = vst.msk [vmem:[%s635 + $0x129] sm:$0xff] %vm334, %v573
        %662 = vst.msk [vmem:[%s635 + $0x139] sm:$0xff] %vm334, %v574
        %663 = vst.msk [vmem:[%s635 + $0x141] sm:$0xff] %vm334, %v575
        %664 = vst.msk [vmem:[%s635 + $0x151] sm:$0xff] %vm334, %v576
        %665 = vst.msk [vmem:[%s635 + $0x159] sm:$0xff] %vm334, %v577
        %666 = vst.msk [vmem:[%s635 + $0x169] sm:$0xff] %vm334, %v578
        %667 = vst.msk [vmem:[%s635 + $0x171] sm:$0xff] %vm334, %v579
        %v668 = vld [vmem:[#allocation2] sm:$0xff]
        %v669 = vld [vmem:[#allocation2 + $0x8] sm:$0xff]
        %v670 = vld [vmem:[#allocation2 + $0x18] sm:$0xff]
        %v671 = vld [vmem:[#allocation2 + $0x20] sm:$0xff]
        %v672 = vld [vmem:[#allocation2 + $0x30] sm:$0xff]
        %v673 = vld [vmem:[#allocation2 + $0x38] sm:$0xff]
        %v674 = vld [vmem:[#allocation2 + $0x48] sm:$0xff]
        %v675 = vld [vmem:[#allocation2 + $0x50] sm:$0xff]
        %v676 = vld [vmem:[#allocation2 + $0x60] sm:$0xff]
        %v677 = vld [vmem:[#allocation2 + $0x68] sm:$0xff]
        %v678 = vld [vmem:[#allocation2 + $0x78] sm:$0xff]
        %v679 = vld [vmem:[#allocation2 + $0x80] sm:$0xff]
        %v680 = vld [vmem:[#allocation2 + $0x90] sm:$0xff]
        %v681 = vld [vmem:[#allocation2 + $0x98] sm:$0xff]
        %v682 = vld [vmem:[#allocation2 + $0xa8] sm:$0xff]
        %v683 = vld [vmem:[#allocation2 + $0xb0] sm:$0xff]
        %v684 = vld [vmem:[#allocation2 + $0xc0] sm:$0xff]
        %v685 = vld [vmem:[#allocation2 + $0xc8] sm:$0xff]
        %v686 = vld [vmem:[#allocation2 + $0xd8] sm:$0xff]
        %v687 = vld [vmem:[#allocation2 + $0xe0] sm:$0xff]
        %v688 = vld [vmem:[#allocation2 + $0xf0] sm:$0xff]
        %v689 = vld [vmem:[#allocation2 + $0xf8] sm:$0xff]
        %v690 = vld [vmem:[#allocation2 + $0x108] sm:$0xff]
        %v691 = vld [vmem:[#allocation2 + $0x110] sm:$0xff]
        %v692 = vld [vmem:[#allocation2 + $0x120] sm:$0xff]
        %v693 = vld [vmem:[#allocation2 + $0x128] sm:$0xff]
        %v694 = vld [vmem:[#allocation2 + $0x138] sm:$0xff]
        %v695 = vld [vmem:[#allocation2 + $0x140] sm:$0xff]
        %v696 = vld [vmem:[#allocation2 + $0x150] sm:$0xff]
        %v697 = vld [vmem:[#allocation2 + $0x158] sm:$0xff]
        %v698 = vld [vmem:[#allocation2 + $0x168] sm:$0xff]
        %v699 = vld [vmem:[#allocation2 + $0x170] sm:$0xff]
        %v700 = vld [vmem:[#allocation2 + $0x1] sm:$0xff]
        %v701 = vld [vmem:[#allocation2 + $0x9] sm:$0xff]
        %v702 = vld [vmem:[#allocation2 + $0x19] sm:$0xff]
        %v703 = vld [vmem:[#allocation2 + $0x21] sm:$0xff]
        %v704 = vld [vmem:[#allocation2 + $0x31] sm:$0xff]
        %v705 = vld [vmem:[#allocation2 + $0x39] sm:$0xff]
        %v706 = vld [vmem:[#allocation2 + $0x49] sm:$0xff]
        %v707 = vld [vmem:[#allocation2 + $0x51] sm:$0xff]
        %v708 = vld [vmem:[#allocation2 + $0x61] sm:$0xff]
        %v709 = vld [vmem:[#allocation2 + $0x69] sm:$0xff]
        %v710 = vld [vmem:[#allocation2 + $0x79] sm:$0xff]
        %v711 = vld [vmem:[#allocation2 + $0x81] sm:$0xff]
        %v712 = vld [vmem:[#allocation2 + $0x91] sm:$0xff]
        %v713 = vld [vmem:[#allocation2 + $0x99] sm:$0xff]
        %v714 = vld [vmem:[#allocation2 + $0xa9] sm:$0xff]
        %v715 = vld [vmem:[#allocation2 + $0xb1] sm:$0xff]
        %v716 = vld [vmem:[#allocation2 + $0xc1] sm:$0xff]
        %v717 = vld [vmem:[#allocation2 + $0xc9] sm:$0xff]
        %v718 = vld [vmem:[#allocation2 + $0xd9] sm:$0xff]
        %v719 = vld [vmem:[#allocation2 + $0xe1] sm:$0xff]
        %v720 = vld [vmem:[#allocation2 + $0xf1] sm:$0xff]
        %v721 = vld [vmem:[#allocation2 + $0xf9] sm:$0xff]
        %v722 = vld [vmem:[#allocation2 + $0x109] sm:$0xff]
        %v723 = vld [vmem:[#allocation2 + $0x111] sm:$0xff]
        %v724 = vld [vmem:[#allocation2 + $0x121] sm:$0xff]
        %v725 = vld [vmem:[#allocation2 + $0x129] sm:$0xff]
        %v726 = vld [vmem:[#allocation2 + $0x139] sm:$0xff]
        %v727 = vld [vmem:[#allocation2 + $0x141] sm:$0xff]
        %v728 = vld [vmem:[#allocation2 + $0x151] sm:$0xff]
        %v729 = vld [vmem:[#allocation2 + $0x159] sm:$0xff]
        %v730 = vld [vmem:[#allocation2 + $0x169] sm:$0xff]
        %v731 = vld [vmem:[#allocation2 + $0x171] sm:$0xff]
        %v732 = vld [vmem:[#allocation2 + $0x2] sm:$0xff]
        %v733 = vld [vmem:[#allocation2 + $0xa] sm:$0xff]
        %v734 = vld [vmem:[#allocation2 + $0x1a] sm:$0xff]
        %v735 = vld [vmem:[#allocation2 + $0x22] sm:$0xff]
        %v736 = vld [vmem:[#allocation2 + $0x32] sm:$0xff]
        %v737 = vld [vmem:[#allocation2 + $0x3a] sm:$0xff]
        %v738 = vld [vmem:[#allocation2 + $0x4a] sm:$0xff]
        %v739 = vld [vmem:[#allocation2 + $0x52] sm:$0xff]
        %v740 = vld [vmem:[#allocation2 + $0x62] sm:$0xff]
        %v741 = vld [vmem:[#allocation2 + $0x6a] sm:$0xff]
        %v742 = vld [vmem:[#allocation2 + $0x7a] sm:$0xff]
        %v743 = vld [vmem:[#allocation2 + $0x82] sm:$0xff]
        %v744 = vld [vmem:[#allocation2 + $0x92] sm:$0xff]
        %v745 = vld [vmem:[#allocation2 + $0x9a] sm:$0xff]
        %v746 = vld [vmem:[#allocation2 + $0xaa] sm:$0xff]
        %v747 = vld [vmem:[#allocation2 + $0xb2] sm:$0xff]
        %v748 = vld [vmem:[#allocation2 + $0xc2] sm:$0xff]
        %v749 = vld [vmem:[#allocation2 + $0xca] sm:$0xff]
        %v750 = vld [vmem:[#allocation2 + $0xda] sm:$0xff]
        %v751 = vld [vmem:[#allocation2 + $0xe2] sm:$0xff]
        %v752 = vld [vmem:[#allocation2 + $0xf2] sm:$0xff]
        %v753 = vld [vmem:[#allocation2 + $0xfa] sm:$0xff]
        %v754 = vld [vmem:[#allocation2 + $0x10a] sm:$0xff]
        %v755 = vld [vmem:[#allocation2 + $0x112] sm:$0xff]
        %v756 = vld [vmem:[#allocation2 + $0x122] sm:$0xff]
        %v757 = vld [vmem:[#allocation2 + $0x12a] sm:$0xff]
        %v758 = vld [vmem:[#allocation2 + $0x13a] sm:$0xff]
        %v759 = vld [vmem:[#allocation2 + $0x142] sm:$0xff]
        %v760 = vld [vmem:[#allocation2 + $0x152] sm:$0xff]
        %v761 = vld [vmem:[#allocation2 + $0x15a] sm:$0xff]
        %v762 = vld [vmem:[#allocation2 + $0x16a] sm:$0xff]
        %v763 = vld [vmem:[#allocation2 + $0x172] sm:$0xff]
        %v764 = vld [vmem:[%s635] sm:$0xff]
        %v765 = vld [vmem:[%s635 + $0x8] sm:$0xff]
        %v766 = vld [vmem:[%s635 + $0x18] sm:$0xff]
        %v767 = vld [vmem:[%s635 + $0x20] sm:$0xff]
        %v768 = vld [vmem:[%s635 + $0x30] sm:$0xff]
        %v769 = vld [vmem:[%s635 + $0x38] sm:$0xff]
        %v770 = vld [vmem:[%s635 + $0x48] sm:$0xff]
        %v771 = vld [vmem:[%s635 + $0x50] sm:$0xff]
        %v772 = vld [vmem:[%s635 + $0x60] sm:$0xff]
        %v773 = vld [vmem:[%s635 + $0x68] sm:$0xff]
        %v774 = vld [vmem:[%s635 + $0x78] sm:$0xff]
        %v775 = vld [vmem:[%s635 + $0x80] sm:$0xff]
        %v776 = vld [vmem:[%s635 + $0x90] sm:$0xff]
        %v777 = vld [vmem:[%s635 + $0x98] sm:$0xff]
        %v778 = vld [vmem:[%s635 + $0xa8] sm:$0xff]
        %v779 = vld [vmem:[%s635 + $0xb0] sm:$0xff]
        %v780 = vld [vmem:[%s635 + $0xc0] sm:$0xff]
        %v781 = vld [vmem:[%s635 + $0xc8] sm:$0xff]
        %v782 = vld [vmem:[%s635 + $0xd8] sm:$0xff]
        %v783 = vld [vmem:[%s635 + $0xe0] sm:$0xff]
        %v784 = vld [vmem:[%s635 + $0xf0] sm:$0xff]
        %v785 = vld [vmem:[%s635 + $0xf8] sm:$0xff]
        %v786 = vld [vmem:[%s635 + $0x108] sm:$0xff]
        %v787 = vld [vmem:[%s635 + $0x110] sm:$0xff]
        %v788 = vld [vmem:[%s635 + $0x120] sm:$0xff]
        %v789 = vld [vmem:[%s635 + $0x128] sm:$0xff]
        %v790 = vld [vmem:[%s635 + $0x138] sm:$0xff]
        %v791 = vld [vmem:[%s635 + $0x140] sm:$0xff]
        %v792 = vld [vmem:[%s635 + $0x150] sm:$0xff]
        %v793 = vld [vmem:[%s635 + $0x158] sm:$0xff]
        %v794 = vld [vmem:[%s635 + $0x168] sm:$0xff]
        %v795 = vld [vmem:[%s635 + $0x170] sm:$0xff]
        %v796 = vld [vmem:[%s635 + $0x1] sm:$0xff]
        %v797 = vld [vmem:[%s635 + $0x9] sm:$0xff]
        %v798 = vld [vmem:[%s635 + $0x19] sm:$0xff]
        %v799 = vld [vmem:[%s635 + $0x21] sm:$0xff]
        %v800 = vld [vmem:[%s635 + $0x31] sm:$0xff]
        %v801 = vld [vmem:[%s635 + $0x39] sm:$0xff]
        %v802 = vld [vmem:[%s635 + $0x49] sm:$0xff]
        %v803 = vld [vmem:[%s635 + $0x51] sm:$0xff]
        %v804 = vld [vmem:[%s635 + $0x61] sm:$0xff]
        %v805 = vld [vmem:[%s635 + $0x69] sm:$0xff]
        %v806 = vld [vmem:[%s635 + $0x79] sm:$0xff]
        %v807 = vld [vmem:[%s635 + $0x81] sm:$0xff]
        %v808 = vld [vmem:[%s635 + $0x91] sm:$0xff]
        %v809 = vld [vmem:[%s635 + $0x99] sm:$0xff]
        %v810 = vld [vmem:[%s635 + $0xa9] sm:$0xff]
        %v811 = vld [vmem:[%s635 + $0xb1] sm:$0xff]
        %v812 = vld [vmem:[%s635 + $0xc1] sm:$0xff]
        %v813 = vld [vmem:[%s635 + $0xc9] sm:$0xff]
        %v814 = vld [vmem:[%s635 + $0xd9] sm:$0xff]
        %v815 = vld [vmem:[%s635 + $0xe1] sm:$0xff]
        %v816 = vld [vmem:[%s635 + $0xf1] sm:$0xff]
        %v817 = vld [vmem:[%s635 + $0xf9] sm:$0xff]
        %v818 = vld [vmem:[%s635 + $0x109] sm:$0xff]
        %v819 = vld [vmem:[%s635 + $0x111] sm:$0xff]
        %v820 = vld [vmem:[%s635 + $0x121] sm:$0xff]
        %v821 = vld [vmem:[%s635 + $0x129] sm:$0xff]
        %v822 = vld [vmem:[%s635 + $0x139] sm:$0xff]
        %v823 = vld [vmem:[%s635 + $0x141] sm:$0xff]
        %v824 = vld [vmem:[%s635 + $0x151] sm:$0xff]
        %v825 = vld [vmem:[%s635 + $0x159] sm:$0xff]
        %v826 = vld [vmem:[%s635 + $0x169] sm:$0xff]
        %v827 = vld [vmem:[%s635 + $0x171] sm:$0xff]
        %v828 = vld [vmem:[%s635 + $0x2] sm:$0xff]
        %v829 = vld [vmem:[%s635 + $0xa] sm:$0xff]
        %v830 = vld [vmem:[%s635 + $0x1a] sm:$0xff]
        %v831 = vld [vmem:[%s635 + $0x22] sm:$0xff]
        %v832 = vld [vmem:[%s635 + $0x32] sm:$0xff]
        %v833 = vld [vmem:[%s635 + $0x3a] sm:$0xff]
        %v834 = vld [vmem:[%s635 + $0x4a] sm:$0xff]
        %v835 = vld [vmem:[%s635 + $0x52] sm:$0xff]
        %v836 = vld [vmem:[%s635 + $0x62] sm:$0xff]
        %v837 = vld [vmem:[%s635 + $0x6a] sm:$0xff]
        %v838 = vld [vmem:[%s635 + $0x7a] sm:$0xff]
        %v839 = vld [vmem:[%s635 + $0x82] sm:$0xff]
        %v840 = vld [vmem:[%s635 + $0x92] sm:$0xff]
        %v841 = vld [vmem:[%s635 + $0x9a] sm:$0xff]
        %v842 = vld [vmem:[%s635 + $0xaa] sm:$0xff]
        %v843 = vld [vmem:[%s635 + $0xb2] sm:$0xff]
        %v844 = vld [vmem:[%s635 + $0xc2] sm:$0xff]
        %v845 = vld [vmem:[%s635 + $0xca] sm:$0xff]
        %v846 = vld [vmem:[%s635 + $0xda] sm:$0xff]
        %v847 = vld [vmem:[%s635 + $0xe2] sm:$0xff]
        %v848 = vld [vmem:[%s635 + $0xf2] sm:$0xff]
        %v849 = vld [vmem:[%s635 + $0xfa] sm:$0xff]
        %v850 = vld [vmem:[%s635 + $0x10a] sm:$0xff]
        %v851 = vld [vmem:[%s635 + $0x112] sm:$0xff]
        %v852 = vld [vmem:[%s635 + $0x122] sm:$0xff]
        %v853 = vld [vmem:[%s635 + $0x12a] sm:$0xff]
        %v854 = vld [vmem:[%s635 + $0x13a] sm:$0xff]
        %v855 = vld [vmem:[%s635 + $0x142] sm:$0xff]
        %v856 = vld [vmem:[%s635 + $0x152] sm:$0xff]
        %v857 = vld [vmem:[%s635 + $0x15a] sm:$0xff]
        %v858 = vld [vmem:[%s635 + $0x16a] sm:$0xff]
        %v859 = vld [vmem:[%s635 + $0x172] sm:$0xff]
        %s860 = scalar_lea.vmem [#allocation2], 48
        %v861 = vld [vmem:[%s860] sm:$0xff]
        %v862 = vld [vmem:[%s860 + $0x8] sm:$0xff]
        %v863 = vld [vmem:[%s860 + $0x18] sm:$0xff]
        %v864 = vld [vmem:[%s860 + $0x20] sm:$0xff]
        %v865 = vld [vmem:[%s860 + $0x30] sm:$0xff]
        %v866 = vld [vmem:[%s860 + $0x38] sm:$0xff]
        %v867 = vld [vmem:[%s860 + $0x48] sm:$0xff]
        %v868 = vld [vmem:[%s860 + $0x50] sm:$0xff]
        %v869 = vld [vmem:[%s860 + $0x60] sm:$0xff]
        %v870 = vld [vmem:[%s860 + $0x68] sm:$0xff]
        %v871 = vld [vmem:[%s860 + $0x78] sm:$0xff]
        %v872 = vld [vmem:[%s860 + $0x80] sm:$0xff]
        %v873 = vld [vmem:[%s860 + $0x90] sm:$0xff]
        %v874 = vld [vmem:[%s860 + $0x98] sm:$0xff]
        %v875 = vld [vmem:[%s860 + $0xa8] sm:$0xff]
        %v876 = vld [vmem:[%s860 + $0xb0] sm:$0xff]
        %v877 = vld [vmem:[%s860 + $0xc0] sm:$0xff]
        %v878 = vld [vmem:[%s860 + $0xc8] sm:$0xff]
        %v879 = vld [vmem:[%s860 + $0xd8] sm:$0xff]
        %v880 = vld [vmem:[%s860 + $0xe0] sm:$0xff]
        %v881 = vld [vmem:[%s860 + $0xf0] sm:$0xff]
        %v882 = vld [vmem:[%s860 + $0xf8] sm:$0xff]
        %v883 = vld [vmem:[%s860 + $0x108] sm:$0xff]
        %v884 = vld [vmem:[%s860 + $0x110] sm:$0xff]
        %v885 = vld [vmem:[%s860 + $0x120] sm:$0xff]
        %v886 = vld [vmem:[%s860 + $0x128] sm:$0xff]
        %v887 = vld [vmem:[%s860 + $0x138] sm:$0xff]
        %v888 = vld [vmem:[%s860 + $0x140] sm:$0xff]
        %v889 = vld [vmem:[%s860 + $0x150] sm:$0xff]
        %v890 = vld [vmem:[%s860 + $0x158] sm:$0xff]
        %v891 = vld [vmem:[%s860 + $0x168] sm:$0xff]
        %v892 = vld [vmem:[%s860 + $0x170] sm:$0xff]
        %v893 = vld [vmem:[%s860 + $0x1] sm:$0xff]
        %v894 = vld [vmem:[%s860 + $0x9] sm:$0xff]
        %v895 = vld [vmem:[%s860 + $0x19] sm:$0xff]
        %v896 = vld [vmem:[%s860 + $0x21] sm:$0xff]
        %v897 = vld [vmem:[%s860 + $0x31] sm:$0xff]
        %v898 = vld [vmem:[%s860 + $0x39] sm:$0xff]
        %v899 = vld [vmem:[%s860 + $0x49] sm:$0xff]
        %v900 = vld [vmem:[%s860 + $0x51] sm:$0xff]
        %v901 = vld [vmem:[%s860 + $0x61] sm:$0xff]
        %v902 = vld [vmem:[%s860 + $0x69] sm:$0xff]
        %v903 = vld [vmem:[%s860 + $0x79] sm:$0xff]
        %v904 = vld [vmem:[%s860 + $0x81] sm:$0xff]
        %v905 = vld [vmem:[%s860 + $0x91] sm:$0xff]
        %v906 = vld [vmem:[%s860 + $0x99] sm:$0xff]
        %v907 = vld [vmem:[%s860 + $0xa9] sm:$0xff]
        %v908 = vld [vmem:[%s860 + $0xb1] sm:$0xff]
        %v909 = vld [vmem:[%s860 + $0xc1] sm:$0xff]
        %v910 = vld [vmem:[%s860 + $0xc9] sm:$0xff]
        %v911 = vld [vmem:[%s860 + $0xd9] sm:$0xff]
        %v912 = vld [vmem:[%s860 + $0xe1] sm:$0xff]
        %v913 = vld [vmem:[%s860 + $0xf1] sm:$0xff]
        %v914 = vld [vmem:[%s860 + $0xf9] sm:$0xff]
        %v915 = vld [vmem:[%s860 + $0x109] sm:$0xff]
        %v916 = vld [vmem:[%s860 + $0x111] sm:$0xff]
        %v917 = vld [vmem:[%s860 + $0x121] sm:$0xff]
        %v918 = vld [vmem:[%s860 + $0x129] sm:$0xff]
        %v919 = vld [vmem:[%s860 + $0x139] sm:$0xff]
        %v920 = vld [vmem:[%s860 + $0x141] sm:$0xff]
        %v921 = vld [vmem:[%s860 + $0x151] sm:$0xff]
        %v922 = vld [vmem:[%s860 + $0x159] sm:$0xff]
        %v923 = vld [vmem:[%s860 + $0x169] sm:$0xff]
        %v924 = vld [vmem:[%s860 + $0x171] sm:$0xff]
        %v925 = vld [vmem:[%s860 + $0x2] sm:$0xff]
        %v926 = vld [vmem:[%s860 + $0xa] sm:$0xff]
        %v927 = vld [vmem:[%s860 + $0x1a] sm:$0xff]
        %v928 = vld [vmem:[%s860 + $0x22] sm:$0xff]
        %v929 = vld [vmem:[%s860 + $0x32] sm:$0xff]
        %v930 = vld [vmem:[%s860 + $0x3a] sm:$0xff]
        %v931 = vld [vmem:[%s860 + $0x4a] sm:$0xff]
        %v932 = vld [vmem:[%s860 + $0x52] sm:$0xff]
        %v933 = vld [vmem:[%s860 + $0x62] sm:$0xff]
        %v934 = vld [vmem:[%s860 + $0x6a] sm:$0xff]
        %v935 = vld [vmem:[%s860 + $0x7a] sm:$0xff]
        %v936 = vld [vmem:[%s860 + $0x82] sm:$0xff]
        %v937 = vld [vmem:[%s860 + $0x92] sm:$0xff]
        %v938 = vld [vmem:[%s860 + $0x9a] sm:$0xff]
        %v939 = vld [vmem:[%s860 + $0xaa] sm:$0xff]
        %v940 = vld [vmem:[%s860 + $0xb2] sm:$0xff]
        %v941 = vld [vmem:[%s860 + $0xc2] sm:$0xff]
        %v942 = vld [vmem:[%s860 + $0xca] sm:$0xff]
        %v943 = vld [vmem:[%s860 + $0xda] sm:$0xff]
        %v944 = vld [vmem:[%s860 + $0xe2] sm:$0xff]
        %v945 = vld [vmem:[%s860 + $0xf2] sm:$0xff]
        %v946 = vld [vmem:[%s860 + $0xfa] sm:$0xff]
        %v947 = vld [vmem:[%s860 + $0x10a] sm:$0xff]
        %v948 = vld [vmem:[%s860 + $0x112] sm:$0xff]
        %v949 = vld [vmem:[%s860 + $0x122] sm:$0xff]
        %v950 = vld [vmem:[%s860 + $0x12a] sm:$0xff]
        %v951 = vld [vmem:[%s860 + $0x13a] sm:$0xff]
        %v952 = vld [vmem:[%s860 + $0x142] sm:$0xff]
        %v953 = vld [vmem:[%s860 + $0x152] sm:$0xff]
        %v954 = vld [vmem:[%s860 + $0x15a] sm:$0xff]
        %v955 = vld [vmem:[%s860 + $0x16a] sm:$0xff]
        %v956 = vld [vmem:[%s860 + $0x172] sm:$0xff]
        %989 = vrot.lane.b32.xlu0 %v700, 8
        %v990 = vpop.permute.xlu0 %989
        %991 = vrot.lane.b32.xlu0 %v701, 8
        %v992 = vpop.permute.xlu0 %991
        %993 = vrot.lane.b32.xlu0 %v702, 8
        %v994 = vpop.permute.xlu0 %993
        %995 = vrot.lane.b32.xlu0 %v703, 8
        %v996 = vpop.permute.xlu0 %995
        %997 = vrot.lane.b32.xlu0 %v704, 8
        %v998 = vpop.permute.xlu0 %997
        %999 = vrot.lane.b32.xlu0 %v705, 8
        %v1000 = vpop.permute.xlu0 %999
        %1001 = vrot.lane.b32.xlu0 %v706, 8
        %v1002 = vpop.permute.xlu0 %1001
        %1003 = vrot.lane.b32.xlu0 %v707, 8
        %v1004 = vpop.permute.xlu0 %1003
        %1005 = vrot.lane.b32.xlu0 %v708, 8
        %v1006 = vpop.permute.xlu0 %1005
        %1007 = vrot.lane.b32.xlu0 %v709, 8
        %v1008 = vpop.permute.xlu0 %1007
        %1009 = vrot.lane.b32.xlu0 %v710, 8
        %v1010 = vpop.permute.xlu0 %1009
        %1011 = vrot.lane.b32.xlu0 %v711, 8
        %v1012 = vpop.permute.xlu0 %1011
        %1013 = vrot.lane.b32.xlu0 %v712, 8
        %v1014 = vpop.permute.xlu0 %1013
        %1015 = vrot.lane.b32.xlu0 %v713, 8
        %v1016 = vpop.permute.xlu0 %1015
        %1017 = vrot.lane.b32.xlu0 %v714, 8
        %v1018 = vpop.permute.xlu0 %1017
        %1019 = vrot.lane.b32.xlu0 %v715, 8
        %v1020 = vpop.permute.xlu0 %1019
        %1021 = vrot.lane.b32.xlu0 %v716, 8
        %v1022 = vpop.permute.xlu0 %1021
        %1023 = vrot.lane.b32.xlu0 %v717, 8
        %v1024 = vpop.permute.xlu0 %1023
        %1025 = vrot.lane.b32.xlu0 %v718, 8
        %v1026 = vpop.permute.xlu0 %1025
        %1027 = vrot.lane.b32.xlu0 %v719, 8
        %v1028 = vpop.permute.xlu0 %1027
        %1029 = vrot.lane.b32.xlu0 %v720, 8
        %v1030 = vpop.permute.xlu0 %1029
        %1031 = vrot.lane.b32.xlu0 %v721, 8
        %v1032 = vpop.permute.xlu0 %1031
        %1033 = vrot.lane.b32.xlu0 %v722, 8
        %v1034 = vpop.permute.xlu0 %1033
        %1035 = vrot.lane.b32.xlu0 %v723, 8
        %v1036 = vpop.permute.xlu0 %1035
        %1037 = vrot.lane.b32.xlu0 %v724, 8
        %v1038 = vpop.permute.xlu0 %1037
        %1039 = vrot.lane.b32.xlu0 %v725, 8
        %v1040 = vpop.permute.xlu0 %1039
        %1041 = vrot.lane.b32.xlu0 %v726, 8
        %v1042 = vpop.permute.xlu0 %1041
        %1043 = vrot.lane.b32.xlu0 %v727, 8
        %v1044 = vpop.permute.xlu0 %1043
        %1045 = vrot.lane.b32.xlu0 %v728, 8
        %v1046 = vpop.permute.xlu0 %1045
        %1047 = vrot.lane.b32.xlu0 %v729, 8
        %v1048 = vpop.permute.xlu0 %1047
        %1049 = vrot.lane.b32.xlu0 %v730, 8
        %v1050 = vpop.permute.xlu0 %1049
        %1051 = vrot.lane.b32.xlu0 %v731, 8
        %v1052 = vpop.permute.xlu0 %1051
        %1117 = vrot.lane.b32.xlu0 %v732, 16
        %v1118 = vpop.permute.xlu0 %1117
        %1119 = vrot.lane.b32.xlu0 %v733, 16
        %v1120 = vpop.permute.xlu0 %1119
        %1121 = vrot.lane.b32.xlu0 %v734, 16
        %v1122 = vpop.permute.xlu0 %1121
        %1123 = vrot.lane.b32.xlu0 %v735, 16
        %v1124 = vpop.permute.xlu0 %1123
        %1125 = vrot.lane.b32.xlu0 %v736, 16
        %v1126 = vpop.permute.xlu0 %1125
        %1127 = vrot.lane.b32.xlu0 %v737, 16
        %v1128 = vpop.permute.xlu0 %1127
        %1129 = vrot.lane.b32.xlu0 %v738, 16
        %v1130 = vpop.permute.xlu0 %1129
        %1131 = vrot.lane.b32.xlu0 %v739, 16
        %v1132 = vpop.permute.xlu0 %1131
        %1133 = vrot.lane.b32.xlu0 %v740, 16
        %v1134 = vpop.permute.xlu0 %1133
        %1135 = vrot.lane.b32.xlu0 %v741, 16
        %v1136 = vpop.permute.xlu0 %1135
        %1137 = vrot.lane.b32.xlu0 %v742, 16
        %v1138 = vpop.permute.xlu0 %1137
        %1139 = vrot.lane.b32.xlu0 %v743, 16
        %v1140 = vpop.permute.xlu0 %1139
        %1141 = vrot.lane.b32.xlu0 %v744, 16
        %v1142 = vpop.permute.xlu0 %1141
        %1143 = vrot.lane.b32.xlu0 %v745, 16
        %v1144 = vpop.permute.xlu0 %1143
        %1145 = vrot.lane.b32.xlu0 %v746, 16
        %v1146 = vpop.permute.xlu0 %1145
        %1147 = vrot.lane.b32.xlu0 %v747, 16
        %v1148 = vpop.permute.xlu0 %1147
        %1149 = vrot.lane.b32.xlu0 %v748, 16
        %v1150 = vpop.permute.xlu0 %1149
        %1151 = vrot.lane.b32.xlu0 %v749, 16
        %v1152 = vpop.permute.xlu0 %1151
        %1153 = vrot.lane.b32.xlu0 %v750, 16
        %v1154 = vpop.permute.xlu0 %1153
        %1155 = vrot.lane.b32.xlu0 %v751, 16
        %v1156 = vpop.permute.xlu0 %1155
        %1157 = vrot.lane.b32.xlu0 %v752, 16
        %v1158 = vpop.permute.xlu0 %1157
        %1159 = vrot.lane.b32.xlu0 %v753, 16
        %v1160 = vpop.permute.xlu0 %1159
        %1161 = vrot.lane.b32.xlu0 %v754, 16
        %v1162 = vpop.permute.xlu0 %1161
        %1163 = vrot.lane.b32.xlu0 %v755, 16
        %v1164 = vpop.permute.xlu0 %1163
        %1165 = vrot.lane.b32.xlu0 %v756, 16
        %v1166 = vpop.permute.xlu0 %1165
        %1167 = vrot.lane.b32.xlu0 %v757, 16
        %v1168 = vpop.permute.xlu0 %1167
        %1169 = vrot.lane.b32.xlu0 %v758, 16
        %v1170 = vpop.permute.xlu0 %1169
        %1171 = vrot.lane.b32.xlu0 %v759, 16
        %v1172 = vpop.permute.xlu0 %1171
        %1173 = vrot.lane.b32.xlu0 %v760, 16
        %v1174 = vpop.permute.xlu0 %1173
        %1175 = vrot.lane.b32.xlu0 %v761, 16
        %v1176 = vpop.permute.xlu0 %1175
        %1177 = vrot.lane.b32.xlu0 %v762, 16
        %v1178 = vpop.permute.xlu0 %1177
        %1179 = vrot.lane.b32.xlu0 %v763, 16
        %v1180 = vpop.permute.xlu0 %1179
        %1245 = vrot.lane.b32.xlu0 %v764, 24
        %v1246 = vpop.permute.xlu0 %1245
        %1247 = vrot.lane.b32.xlu0 %v765, 24
        %v1248 = vpop.permute.xlu0 %1247
        %1249 = vrot.lane.b32.xlu0 %v766, 24
        %v1250 = vpop.permute.xlu0 %1249
        %1251 = vrot.lane.b32.xlu0 %v767, 24
        %v1252 = vpop.permute.xlu0 %1251
        %1253 = vrot.lane.b32.xlu0 %v768, 24
        %v1254 = vpop.permute.xlu0 %1253
        %1255 = vrot.lane.b32.xlu0 %v769, 24
        %v1256 = vpop.permute.xlu0 %1255
        %1257 = vrot.lane.b32.xlu0 %v770, 24
        %v1258 = vpop.permute.xlu0 %1257
        %1259 = vrot.lane.b32.xlu0 %v771, 24
        %v1260 = vpop.permute.xlu0 %1259
        %1261 = vrot.lane.b32.xlu0 %v772, 24
        %v1262 = vpop.permute.xlu0 %1261
        %1263 = vrot.lane.b32.xlu0 %v773, 24
        %v1264 = vpop.permute.xlu0 %1263
        %1265 = vrot.lane.b32.xlu0 %v774, 24
        %v1266 = vpop.permute.xlu0 %1265
        %1267 = vrot.lane.b32.xlu0 %v775, 24
        %v1268 = vpop.permute.xlu0 %1267
        %1269 = vrot.lane.b32.xlu0 %v776, 24
        %v1270 = vpop.permute.xlu0 %1269
        %1271 = vrot.lane.b32.xlu0 %v777, 24
        %v1272 = vpop.permute.xlu0 %1271
        %1273 = vrot.lane.b32.xlu0 %v778, 24
        %v1274 = vpop.permute.xlu0 %1273
        %1275 = vrot.lane.b32.xlu0 %v779, 24
        %v1276 = vpop.permute.xlu0 %1275
        %1277 = vrot.lane.b32.xlu0 %v780, 24
        %v1278 = vpop.permute.xlu0 %1277
        %1279 = vrot.lane.b32.xlu0 %v781, 24
        %v1280 = vpop.permute.xlu0 %1279
        %1281 = vrot.lane.b32.xlu0 %v782, 24
        %v1282 = vpop.permute.xlu0 %1281
        %1283 = vrot.lane.b32.xlu0 %v783, 24
        %v1284 = vpop.permute.xlu0 %1283
        %1285 = vrot.lane.b32.xlu0 %v784, 24
        %v1286 = vpop.permute.xlu0 %1285
        %1287 = vrot.lane.b32.xlu0 %v785, 24
        %v1288 = vpop.permute.xlu0 %1287
        %1289 = vrot.lane.b32.xlu0 %v786, 24
        %v1290 = vpop.permute.xlu0 %1289
        %1291 = vrot.lane.b32.xlu0 %v787, 24
        %v1292 = vpop.permute.xlu0 %1291
        %1293 = vrot.lane.b32.xlu0 %v788, 24
        %v1294 = vpop.permute.xlu0 %1293
        %1295 = vrot.lane.b32.xlu0 %v789, 24
        %v1296 = vpop.permute.xlu0 %1295
        %1297 = vrot.lane.b32.xlu0 %v790, 24
        %v1298 = vpop.permute.xlu0 %1297
        %1299 = vrot.lane.b32.xlu0 %v791, 24
        %v1300 = vpop.permute.xlu0 %1299
        %1301 = vrot.lane.b32.xlu0 %v792, 24
        %v1302 = vpop.permute.xlu0 %1301
        %1303 = vrot.lane.b32.xlu0 %v793, 24
        %v1304 = vpop.permute.xlu0 %1303
        %1305 = vrot.lane.b32.xlu0 %v794, 24
        %v1306 = vpop.permute.xlu0 %1305
        %1307 = vrot.lane.b32.xlu0 %v795, 24
        %v1308 = vpop.permute.xlu0 %1307
        %1373 = vrot.lane.b32.xlu0 %v796, 32
        %v1374 = vpop.permute.xlu0 %1373
        %1375 = vrot.lane.b32.xlu0 %v797, 32
        %v1376 = vpop.permute.xlu0 %1375
        %1377 = vrot.lane.b32.xlu0 %v798, 32
        %v1378 = vpop.permute.xlu0 %1377
        %1379 = vrot.lane.b32.xlu0 %v799, 32
        %v1380 = vpop.permute.xlu0 %1379
        %1381 = vrot.lane.b32.xlu0 %v800, 32
        %v1382 = vpop.permute.xlu0 %1381
        %1383 = vrot.lane.b32.xlu0 %v801, 32
        %v1384 = vpop.permute.xlu0 %1383
        %1385 = vrot.lane.b32.xlu0 %v802, 32
        %v1386 = vpop.permute.xlu0 %1385
        %1387 = vrot.lane.b32.xlu0 %v803, 32
        %v1388 = vpop.permute.xlu0 %1387
        %1389 = vrot.lane.b32.xlu0 %v804, 32
        %v1390 = vpop.permute.xlu0 %1389
        %1391 = vrot.lane.b32.xlu0 %v805, 32
        %v1392 = vpop.permute.xlu0 %1391
        %1393 = vrot.lane.b32.xlu0 %v806, 32
        %v1394 = vpop.permute.xlu0 %1393
        %1395 = vrot.lane.b32.xlu0 %v807, 32
        %v1396 = vpop.permute.xlu0 %1395
        %1397 = vrot.lane.b32.xlu0 %v808, 32
        %v1398 = vpop.permute.xlu0 %1397
        %1399 = vrot.lane.b32.xlu0 %v809, 32
        %v1400 = vpop.permute.xlu0 %1399
        %1401 = vrot.lane.b32.xlu0 %v810, 32
        %v1402 = vpop.permute.xlu0 %1401
        %1403 = vrot.lane.b32.xlu0 %v811, 32
        %v1404 = vpop.permute.xlu0 %1403
        %1405 = vrot.lane.b32.xlu0 %v812, 32
        %v1406 = vpop.permute.xlu0 %1405
        %1407 = vrot.lane.b32.xlu0 %v813, 32
        %v1408 = vpop.permute.xlu0 %1407
        %1409 = vrot.lane.b32.xlu0 %v814, 32
        %v1410 = vpop.permute.xlu0 %1409
        %1411 = vrot.lane.b32.xlu0 %v815, 32
        %v1412 = vpop.permute.xlu0 %1411
        %1413 = vrot.lane.b32.xlu0 %v816, 32
        %v1414 = vpop.permute.xlu0 %1413
        %1415 = vrot.lane.b32.xlu0 %v817, 32
        %v1416 = vpop.permute.xlu0 %1415
        %1417 = vrot.lane.b32.xlu0 %v818, 32
        %v1418 = vpop.permute.xlu0 %1417
        %1419 = vrot.lane.b32.xlu0 %v819, 32
        %v1420 = vpop.permute.xlu0 %1419
        %1421 = vrot.lane.b32.xlu0 %v820, 32
        %v1422 = vpop.permute.xlu0 %1421
        %1423 = vrot.lane.b32.xlu0 %v821, 32
        %v1424 = vpop.permute.xlu0 %1423
        %1425 = vrot.lane.b32.xlu0 %v822, 32
        %v1426 = vpop.permute.xlu0 %1425
        %1427 = vrot.lane.b32.xlu0 %v823, 32
        %v1428 = vpop.permute.xlu0 %1427
        %1429 = vrot.lane.b32.xlu0 %v824, 32
        %v1430 = vpop.permute.xlu0 %1429
        %1431 = vrot.lane.b32.xlu0 %v825, 32
        %v1432 = vpop.permute.xlu0 %1431
        %1433 = vrot.lane.b32.xlu0 %v826, 32
        %v1434 = vpop.permute.xlu0 %1433
        %1435 = vrot.lane.b32.xlu0 %v827, 32
        %v1436 = vpop.permute.xlu0 %1435
        %1501 = vrot.lane.b32.xlu0 %v828, 40
        %v1502 = vpop.permute.xlu0 %1501
        %1503 = vrot.lane.b32.xlu0 %v829, 40
        %v1504 = vpop.permute.xlu0 %1503
        %1505 = vrot.lane.b32.xlu0 %v830, 40
        %v1506 = vpop.permute.xlu0 %1505
        %1507 = vrot.lane.b32.xlu0 %v831, 40
        %v1508 = vpop.permute.xlu0 %1507
        %1509 = vrot.lane.b32.xlu0 %v832, 40
        %v1510 = vpop.permute.xlu0 %1509
        %1511 = vrot.lane.b32.xlu0 %v833, 40
        %v1512 = vpop.permute.xlu0 %1511
        %1513 = vrot.lane.b32.xlu0 %v834, 40
        %v1514 = vpop.permute.xlu0 %1513
        %1515 = vrot.lane.b32.xlu0 %v835, 40
        %v1516 = vpop.permute.xlu0 %1515
        %1517 = vrot.lane.b32.xlu0 %v836, 40
        %v1518 = vpop.permute.xlu0 %1517
        %1519 = vrot.lane.b32.xlu0 %v837, 40
        %v1520 = vpop.permute.xlu0 %1519
        %1521 = vrot.lane.b32.xlu0 %v838, 40
        %v1522 = vpop.permute.xlu0 %1521
        %1523 = vrot.lane.b32.xlu0 %v839, 40
        %v1524 = vpop.permute.xlu0 %1523
        %1525 = vrot.lane.b32.xlu0 %v840, 40
        %v1526 = vpop.permute.xlu0 %1525
        %1527 = vrot.lane.b32.xlu0 %v841, 40
        %v1528 = vpop.permute.xlu0 %1527
        %1529 = vrot.lane.b32.xlu0 %v842, 40
        %v1530 = vpop.permute.xlu0 %1529
        %1531 = vrot.lane.b32.xlu0 %v843, 40
        %v1532 = vpop.permute.xlu0 %1531
        %1533 = vrot.lane.b32.xlu0 %v844, 40
        %v1534 = vpop.permute.xlu0 %1533
        %1535 = vrot.lane.b32.xlu0 %v845, 40
        %v1536 = vpop.permute.xlu0 %1535
        %1537 = vrot.lane.b32.xlu0 %v846, 40
        %v1538 = vpop.permute.xlu0 %1537
        %1539 = vrot.lane.b32.xlu0 %v847, 40
        %v1540 = vpop.permute.xlu0 %1539
        %1541 = vrot.lane.b32.xlu0 %v848, 40
        %v1542 = vpop.permute.xlu0 %1541
        %1543 = vrot.lane.b32.xlu0 %v849, 40
        %v1544 = vpop.permute.xlu0 %1543
        %1545 = vrot.lane.b32.xlu0 %v850, 40
        %v1546 = vpop.permute.xlu0 %1545
        %1547 = vrot.lane.b32.xlu0 %v851, 40
        %v1548 = vpop.permute.xlu0 %1547
        %1549 = vrot.lane.b32.xlu0 %v852, 40
        %v1550 = vpop.permute.xlu0 %1549
        %1551 = vrot.lane.b32.xlu0 %v853, 40
        %v1552 = vpop.permute.xlu0 %1551
        %1553 = vrot.lane.b32.xlu0 %v854, 40
        %v1554 = vpop.permute.xlu0 %1553
        %1555 = vrot.lane.b32.xlu0 %v855, 40
        %v1556 = vpop.permute.xlu0 %1555
        %1557 = vrot.lane.b32.xlu0 %v856, 40
        %v1558 = vpop.permute.xlu0 %1557
        %1559 = vrot.lane.b32.xlu0 %v857, 40
        %v1560 = vpop.permute.xlu0 %1559
        %1561 = vrot.lane.b32.xlu0 %v858, 40
        %v1562 = vpop.permute.xlu0 %1561
        %1563 = vrot.lane.b32.xlu0 %v859, 40
        %v1564 = vpop.permute.xlu0 %1563
        %1629 = vrot.lane.b32.xlu0 %v861, 48
        %v1630 = vpop.permute.xlu0 %1629
        %1631 = vrot.lane.b32.xlu0 %v862, 48
        %v1632 = vpop.permute.xlu0 %1631
        %1633 = vrot.lane.b32.xlu0 %v863, 48
        %v1634 = vpop.permute.xlu0 %1633
        %1635 = vrot.lane.b32.xlu0 %v864, 48
        %v1636 = vpop.permute.xlu0 %1635
        %1637 = vrot.lane.b32.xlu0 %v865, 48
        %v1638 = vpop.permute.xlu0 %1637
        %1639 = vrot.lane.b32.xlu0 %v866, 48
        %v1640 = vpop.permute.xlu0 %1639
        %1641 = vrot.lane.b32.xlu0 %v867, 48
        %v1642 = vpop.permute.xlu0 %1641
        %1643 = vrot.lane.b32.xlu0 %v868, 48
        %v1644 = vpop.permute.xlu0 %1643
        %1645 = vrot.lane.b32.xlu0 %v869, 48
        %v1646 = vpop.permute.xlu0 %1645
        %1647 = vrot.lane.b32.xlu0 %v870, 48
        %v1648 = vpop.permute.xlu0 %1647
        %1649 = vrot.lane.b32.xlu0 %v871, 48
        %v1650 = vpop.permute.xlu0 %1649
        %1651 = vrot.lane.b32.xlu0 %v872, 48
        %v1652 = vpop.permute.xlu0 %1651
        %1653 = vrot.lane.b32.xlu0 %v873, 48
        %v1654 = vpop.permute.xlu0 %1653
        %1655 = vrot.lane.b32.xlu0 %v874, 48
        %v1656 = vpop.permute.xlu0 %1655
        %1657 = vrot.lane.b32.xlu0 %v875, 48
        %v1658 = vpop.permute.xlu0 %1657
        %1659 = vrot.lane.b32.xlu0 %v876, 48
        %v1660 = vpop.permute.xlu0 %1659
        %1661 = vrot.lane.b32.xlu0 %v877, 48
        %v1662 = vpop.permute.xlu0 %1661
        %1663 = vrot.lane.b32.xlu0 %v878, 48
        %v1664 = vpop.permute.xlu0 %1663
        %1665 = vrot.lane.b32.xlu0 %v879, 48
        %v1666 = vpop.permute.xlu0 %1665
        %1667 = vrot.lane.b32.xlu0 %v880, 48
        %v1668 = vpop.permute.xlu0 %1667
        %1669 = vrot.lane.b32.xlu0 %v881, 48
        %v1670 = vpop.permute.xlu0 %1669
        %1671 = vrot.lane.b32.xlu0 %v882, 48
        %v1672 = vpop.permute.xlu0 %1671
        %1673 = vrot.lane.b32.xlu0 %v883, 48
        %v1674 = vpop.permute.xlu0 %1673
        %1675 = vrot.lane.b32.xlu0 %v884, 48
        %v1676 = vpop.permute.xlu0 %1675
        %1677 = vrot.lane.b32.xlu0 %v885, 48
        %v1678 = vpop.permute.xlu0 %1677
        %1679 = vrot.lane.b32.xlu0 %v886, 48
        %v1680 = vpop.permute.xlu0 %1679
        %1681 = vrot.lane.b32.xlu0 %v887, 48
        %v1682 = vpop.permute.xlu0 %1681
        %1683 = vrot.lane.b32.xlu0 %v888, 48
        %v1684 = vpop.permute.xlu0 %1683
        %1685 = vrot.lane.b32.xlu0 %v889, 48
        %v1686 = vpop.permute.xlu0 %1685
        %1687 = vrot.lane.b32.xlu0 %v890, 48
        %v1688 = vpop.permute.xlu0 %1687
        %1689 = vrot.lane.b32.xlu0 %v891, 48
        %v1690 = vpop.permute.xlu0 %1689
        %1691 = vrot.lane.b32.xlu0 %v892, 48
        %v1692 = vpop.permute.xlu0 %1691
        %1757 = vrot.lane.b32.xlu0 %v893, 56
        %v1758 = vpop.permute.xlu0 %1757
        %1759 = vrot.lane.b32.xlu0 %v894, 56
        %v1760 = vpop.permute.xlu0 %1759
        %1761 = vrot.lane.b32.xlu0 %v895, 56
        %v1762 = vpop.permute.xlu0 %1761
        %1763 = vrot.lane.b32.xlu0 %v896, 56
        %v1764 = vpop.permute.xlu0 %1763
        %1765 = vrot.lane.b32.xlu0 %v897, 56
        %v1766 = vpop.permute.xlu0 %1765
        %1767 = vrot.lane.b32.xlu0 %v898, 56
        %v1768 = vpop.permute.xlu0 %1767
        %1769 = vrot.lane.b32.xlu0 %v899, 56
        %v1770 = vpop.permute.xlu0 %1769
        %1771 = vrot.lane.b32.xlu0 %v900, 56
        %v1772 = vpop.permute.xlu0 %1771
        %1773 = vrot.lane.b32.xlu0 %v901, 56
        %v1774 = vpop.permute.xlu0 %1773
        %1775 = vrot.lane.b32.xlu0 %v902, 56
        %v1776 = vpop.permute.xlu0 %1775
        %1777 = vrot.lane.b32.xlu0 %v903, 56
        %v1778 = vpop.permute.xlu0 %1777
        %1779 = vrot.lane.b32.xlu0 %v904, 56
        %v1780 = vpop.permute.xlu0 %1779
        %1781 = vrot.lane.b32.xlu0 %v905, 56
        %v1782 = vpop.permute.xlu0 %1781
        %1783 = vrot.lane.b32.xlu0 %v906, 56
        %v1784 = vpop.permute.xlu0 %1783
        %1785 = vrot.lane.b32.xlu0 %v907, 56
        %v1786 = vpop.permute.xlu0 %1785
        %1787 = vrot.lane.b32.xlu0 %v908, 56
        %v1788 = vpop.permute.xlu0 %1787
        %1789 = vrot.lane.b32.xlu0 %v909, 56
        %v1790 = vpop.permute.xlu0 %1789
        %1791 = vrot.lane.b32.xlu0 %v910, 56
        %v1792 = vpop.permute.xlu0 %1791
        %1793 = vrot.lane.b32.xlu0 %v911, 56
        %v1794 = vpop.permute.xlu0 %1793
        %1795 = vrot.lane.b32.xlu0 %v912, 56
        %v1796 = vpop.permute.xlu0 %1795
        %1797 = vrot.lane.b32.xlu0 %v913, 56
        %v1798 = vpop.permute.xlu0 %1797
        %1799 = vrot.lane.b32.xlu0 %v914, 56
        %v1800 = vpop.permute.xlu0 %1799
        %1801 = vrot.lane.b32.xlu0 %v915, 56
        %v1802 = vpop.permute.xlu0 %1801
        %1803 = vrot.lane.b32.xlu0 %v916, 56
        %v1804 = vpop.permute.xlu0 %1803
        %1805 = vrot.lane.b32.xlu0 %v917, 56
        %v1806 = vpop.permute.xlu0 %1805
        %1807 = vrot.lane.b32.xlu0 %v918, 56
        %v1808 = vpop.permute.xlu0 %1807
        %1809 = vrot.lane.b32.xlu0 %v919, 56
        %v1810 = vpop.permute.xlu0 %1809
        %1811 = vrot.lane.b32.xlu0 %v920, 56
        %v1812 = vpop.permute.xlu0 %1811
        %1813 = vrot.lane.b32.xlu0 %v921, 56
        %v1814 = vpop.permute.xlu0 %1813
        %1815 = vrot.lane.b32.xlu0 %v922, 56
        %v1816 = vpop.permute.xlu0 %1815
        %1817 = vrot.lane.b32.xlu0 %v923, 56
        %v1818 = vpop.permute.xlu0 %1817
        %1819 = vrot.lane.b32.xlu0 %v924, 56
        %v1820 = vpop.permute.xlu0 %1819
        %1885 = vrot.lane.b32.xlu0 %v925, 64
        %v1886 = vpop.permute.xlu0 %1885
        %1887 = vrot.lane.b32.xlu0 %v926, 64
        %v1888 = vpop.permute.xlu0 %1887
        %1889 = vrot.lane.b32.xlu0 %v927, 64
        %v1890 = vpop.permute.xlu0 %1889
        %1891 = vrot.lane.b32.xlu0 %v928, 64
        %v1892 = vpop.permute.xlu0 %1891
        %1893 = vrot.lane.b32.xlu0 %v929, 64
        %v1894 = vpop.permute.xlu0 %1893
        %1895 = vrot.lane.b32.xlu0 %v930, 64
        %v1896 = vpop.permute.xlu0 %1895
        %1897 = vrot.lane.b32.xlu0 %v931, 64
        %v1898 = vpop.permute.xlu0 %1897
        %1899 = vrot.lane.b32.xlu0 %v932, 64
        %v1900 = vpop.permute.xlu0 %1899
        %1901 = vrot.lane.b32.xlu0 %v933, 64
        %v1902 = vpop.permute.xlu0 %1901
        %1903 = vrot.lane.b32.xlu0 %v934, 64
        %v1904 = vpop.permute.xlu0 %1903
        %1905 = vrot.lane.b32.xlu0 %v935, 64
        %v1906 = vpop.permute.xlu0 %1905
        %1907 = vrot.lane.b32.xlu0 %v936, 64
        %v1908 = vpop.permute.xlu0 %1907
        %1909 = vrot.lane.b32.xlu0 %v937, 64
        %v1910 = vpop.permute.xlu0 %1909
        %1911 = vrot.lane.b32.xlu0 %v938, 64
        %v1912 = vpop.permute.xlu0 %1911
        %1913 = vrot.lane.b32.xlu0 %v939, 64
        %v1914 = vpop.permute.xlu0 %1913
        %1915 = vrot.lane.b32.xlu0 %v940, 64
        %v1916 = vpop.permute.xlu0 %1915
        %1917 = vrot.lane.b32.xlu0 %v941, 64
        %v1918 = vpop.permute.xlu0 %1917
        %1919 = vrot.lane.b32.xlu0 %v942, 64
        %v1920 = vpop.permute.xlu0 %1919
        %1921 = vrot.lane.b32.xlu0 %v943, 64
        %v1922 = vpop.permute.xlu0 %1921
        %1923 = vrot.lane.b32.xlu0 %v944, 64
        %v1924 = vpop.permute.xlu0 %1923
        %1925 = vrot.lane.b32.xlu0 %v945, 64
        %v1926 = vpop.permute.xlu0 %1925
        %1927 = vrot.lane.b32.xlu0 %v946, 64
        %v1928 = vpop.permute.xlu0 %1927
        %1929 = vrot.lane.b32.xlu0 %v947, 64
        %v1930 = vpop.permute.xlu0 %1929
        %1931 = vrot.lane.b32.xlu0 %v948, 64
        %v1932 = vpop.permute.xlu0 %1931
        %1933 = vrot.lane.b32.xlu0 %v949, 64
        %v1934 = vpop.permute.xlu0 %1933
        %1935 = vrot.lane.b32.xlu0 %v950, 64
        %v1936 = vpop.permute.xlu0 %1935
        %1937 = vrot.lane.b32.xlu0 %v951, 64
        %v1938 = vpop.permute.xlu0 %1937
        %1939 = vrot.lane.b32.xlu0 %v952, 64
        %v1940 = vpop.permute.xlu0 %1939
        %1941 = vrot.lane.b32.xlu0 %v953, 64
        %v1942 = vpop.permute.xlu0 %1941
        %1943 = vrot.lane.b32.xlu0 %v954, 64
        %v1944 = vpop.permute.xlu0 %1943
        %1945 = vrot.lane.b32.xlu0 %v955, 64
        %v1946 = vpop.permute.xlu0 %1945
        %1947 = vrot.lane.b32.xlu0 %v956, 64
        %v1948 = vpop.permute.xlu0 %1947
        %v1981 = vsel %vm334, %v668, %v990
        %v1982 = vsel %vm334, %v669, %v992
        %v1983 = vsel %vm334, %v670, %v994
        %v1984 = vsel %vm334, %v671, %v996
        %v1985 = vsel %vm334, %v672, %v998
        %v1986 = vsel %vm334, %v673, %v1000
        %v1987 = vsel %vm334, %v674, %v1002
        %v1988 = vsel %vm334, %v675, %v1004
        %v1989 = vsel %vm334, %v676, %v1006
        %v1990 = vsel %vm334, %v677, %v1008
        %v1991 = vsel %vm334, %v678, %v1010
        %v1992 = vsel %vm334, %v679, %v1012
        %v1993 = vsel %vm334, %v680, %v1014
        %v1994 = vsel %vm334, %v681, %v1016
        %v1995 = vsel %vm334, %v682, %v1018
        %v1996 = vsel %vm334, %v683, %v1020
        %v1997 = vsel %vm334, %v684, %v1022
        %v1998 = vsel %vm334, %v685, %v1024
        %v1999 = vsel %vm334, %v686, %v1026
        %v2000 = vsel %vm334, %v687, %v1028
        %v2001 = vsel %vm334, %v688, %v1030
        %v2002 = vsel %vm334, %v689, %v1032
        %v2003 = vsel %vm334, %v690, %v1034
        %v2004 = vsel %vm334, %v691, %v1036
        %v2005 = vsel %vm334, %v692, %v1038
        %v2006 = vsel %vm334, %v693, %v1040
        %v2007 = vsel %vm334, %v694, %v1042
        %v2008 = vsel %vm334, %v695, %v1044
        %v2009 = vsel %vm334, %v696, %v1046
        %v2010 = vsel %vm334, %v697, %v1048
        %v2011 = vsel %vm334, %v698, %v1050
        %v2012 = vsel %vm334, %v699, %v1052
        %vm2013 = vcmask 130048
        %v2014 = vsel %vm2013, %v1981, %v1118
        %v2015 = vsel %vm2013, %v1982, %v1120
        %v2016 = vsel %vm2013, %v1983, %v1122
        %v2017 = vsel %vm2013, %v1984, %v1124
        %v2018 = vsel %vm2013, %v1985, %v1126
        %v2019 = vsel %vm2013, %v1986, %v1128
        %v2020 = vsel %vm2013, %v1987, %v1130
        %v2021 = vsel %vm2013, %v1988, %v1132
        %v2022 = vsel %vm2013, %v1989, %v1134
        %v2023 = vsel %vm2013, %v1990, %v1136
        %v2024 = vsel %vm2013, %v1991, %v1138
        %v2025 = vsel %vm2013, %v1992, %v1140
        %v2026 = vsel %vm2013, %v1993, %v1142
        %v2027 = vsel %vm2013, %v1994, %v1144
        %v2028 = vsel %vm2013, %v1995, %v1146
        %v2029 = vsel %vm2013, %v1996, %v1148
        %v2030 = vsel %vm2013, %v1997, %v1150
        %v2031 = vsel %vm2013, %v1998, %v1152
        %v2032 = vsel %vm2013, %v1999, %v1154
        %v2033 = vsel %vm2013, %v2000, %v1156
        %v2034 = vsel %vm2013, %v2001, %v1158
        %v2035 = vsel %vm2013, %v2002, %v1160
        %v2036 = vsel %vm2013, %v2003, %v1162
        %v2037 = vsel %vm2013, %v2004, %v1164
        %v2038 = vsel %vm2013, %v2005, %v1166
        %v2039 = vsel %vm2013, %v2006, %v1168
        %v2040 = vsel %vm2013, %v2007, %v1170
        %v2041 = vsel %vm2013, %v2008, %v1172
        %v2042 = vsel %vm2013, %v2009, %v1174
        %v2043 = vsel %vm2013, %v2010, %v1176
        %v2044 = vsel %vm2013, %v2011, %v1178
        %v2045 = vsel %vm2013, %v2012, %v1180
        %vm2046 = vcmask 195584
        %v2047 = vsel %vm2046, %v2014, %v1246
        %v2048 = vsel %vm2046, %v2015, %v1248
        %v2049 = vsel %vm2046, %v2016, %v1250
        %v2050 = vsel %vm2046, %v2017, %v1252
        %v2051 = vsel %vm2046, %v2018, %v1254
        %v2052 = vsel %vm2046, %v2019, %v1256
        %v2053 = vsel %vm2046, %v2020, %v1258
        %v2054 = vsel %vm2046, %v2021, %v1260
        %v2055 = vsel %vm2046, %v2022, %v1262
        %v2056 = vsel %vm2046, %v2023, %v1264
        %v2057 = vsel %vm2046, %v2024, %v1266
        %v2058 = vsel %vm2046, %v2025, %v1268
        %v2059 = vsel %vm2046, %v2026, %v1270
        %v2060 = vsel %vm2046, %v2027, %v1272
        %v2061 = vsel %vm2046, %v2028, %v1274
        %v2062 = vsel %vm2046, %v2029, %v1276
        %v2063 = vsel %vm2046, %v2030, %v1278
        %v2064 = vsel %vm2046, %v2031, %v1280
        %v2065 = vsel %vm2046, %v2032, %v1282
        %v2066 = vsel %vm2046, %v2033, %v1284
        %v2067 = vsel %vm2046, %v2034, %v1286
        %v2068 = vsel %vm2046, %v2035, %v1288
        %v2069 = vsel %vm2046, %v2036, %v1290
        %v2070 = vsel %vm2046, %v2037, %v1292
        %v2071 = vsel %vm2046, %v2038, %v1294
        %v2072 = vsel %vm2046, %v2039, %v1296
        %v2073 = vsel %vm2046, %v2040, %v1298
        %v2074 = vsel %vm2046, %v2041, %v1300
        %v2075 = vsel %vm2046, %v2042, %v1302
        %v2076 = vsel %vm2046, %v2043, %v1304
        %v2077 = vsel %vm2046, %v2044, %v1306
        %v2078 = vsel %vm2046, %v2045, %v1308
        %vm2079 = vcmask 261120
        %v2080 = vsel %vm2079, %v2047, %v1374
        %v2081 = vsel %vm2079, %v2048, %v1376
        %v2082 = vsel %vm2079, %v2049, %v1378
        %v2083 = vsel %vm2079, %v2050, %v1380
        %v2084 = vsel %vm2079, %v2051, %v1382
        %v2085 = vsel %vm2079, %v2052, %v1384
        %v2086 = vsel %vm2079, %v2053, %v1386
        %v2087 = vsel %vm2079, %v2054, %v1388
        %v2088 = vsel %vm2079, %v2055, %v1390
        %v2089 = vsel %vm2079, %v2056, %v1392
        %v2090 = vsel %vm2079, %v2057, %v1394
        %v2091 = vsel %vm2079, %v2058, %v1396
        %v2092 = vsel %vm2079, %v2059, %v1398
        %v2093 = vsel %vm2079, %v2060, %v1400
        %v2094 = vsel %vm2079, %v2061, %v1402
        %v2095 = vsel %vm2079, %v2062, %v1404
        %v2096 = vsel %vm2079, %v2063, %v1406
        %v2097 = vsel %vm2079, %v2064, %v1408
        %v2098 = vsel %vm2079, %v2065, %v1410
        %v2099 = vsel %vm2079, %v2066, %v1412
        %v2100 = vsel %vm2079, %v2067, %v1414
        %v2101 = vsel %vm2079, %v2068, %v1416
        %v2102 = vsel %vm2079, %v2069, %v1418
        %v2103 = vsel %vm2079, %v2070, %v1420
        %v2104 = vsel %vm2079, %v2071, %v1422
        %v2105 = vsel %vm2079, %v2072, %v1424
        %v2106 = vsel %vm2079, %v2073, %v1426
        %v2107 = vsel %vm2079, %v2074, %v1428
        %v2108 = vsel %vm2079, %v2075, %v1430
        %v2109 = vsel %vm2079, %v2076, %v1432
        %v2110 = vsel %vm2079, %v2077, %v1434
        %v2111 = vsel %vm2079, %v2078, %v1436
        %vm2112 = vcmask 326656
        %v2113 = vsel %vm2112, %v2080, %v1502
        %v2114 = vsel %vm2112, %v2081, %v1504
        %v2115 = vsel %vm2112, %v2082, %v1506
        %v2116 = vsel %vm2112, %v2083, %v1508
        %v2117 = vsel %vm2112, %v2084, %v1510
        %v2118 = vsel %vm2112, %v2085, %v1512
        %v2119 = vsel %vm2112, %v2086, %v1514
        %v2120 = vsel %vm2112, %v2087, %v1516
        %v2121 = vsel %vm2112, %v2088, %v1518
        %v2122 = vsel %vm2112, %v2089, %v1520
        %v2123 = vsel %vm2112, %v2090, %v1522
        %v2124 = vsel %vm2112, %v2091, %v1524
        %v2125 = vsel %vm2112, %v2092, %v1526
        %v2126 = vsel %vm2112, %v2093, %v1528
        %v2127 = vsel %vm2112, %v2094, %v1530
        %v2128 = vsel %vm2112, %v2095, %v1532
        %v2129 = vsel %vm2112, %v2096, %v1534
        %v2130 = vsel %vm2112, %v2097, %v1536
        %v2131 = vsel %vm2112, %v2098, %v1538
        %v2132 = vsel %vm2112, %v2099, %v1540
        %v2133 = vsel %vm2112, %v2100, %v1542
        %v2134 = vsel %vm2112, %v2101, %v1544
        %v2135 = vsel %vm2112, %v2102, %v1546
        %v2136 = vsel %vm2112, %v2103, %v1548
        %v2137 = vsel %vm2112, %v2104, %v1550
        %v2138 = vsel %vm2112, %v2105, %v1552
        %v2139 = vsel %vm2112, %v2106, %v1554
        %v2140 = vsel %vm2112, %v2107, %v1556
        %v2141 = vsel %vm2112, %v2108, %v1558
        %v2142 = vsel %vm2112, %v2109, %v1560
        %v2143 = vsel %vm2112, %v2110, %v1562
        %v2144 = vsel %vm2112, %v2111, %v1564
        %vm2145 = vcmask 392192
        %v2146 = vsel %vm2145, %v2113, %v1630
        %v2147 = vsel %vm2145, %v2114, %v1632
        %v2148 = vsel %vm2145, %v2115, %v1634
        %v2149 = vsel %vm2145, %v2116, %v1636
        %v2150 = vsel %vm2145, %v2117, %v1638
        %v2151 = vsel %vm2145, %v2118, %v1640
        %v2152 = vsel %vm2145, %v2119, %v1642
        %v2153 = vsel %vm2145, %v2120, %v1644
        %v2154 = vsel %vm2145, %v2121, %v1646
        %v2155 = vsel %vm2145, %v2122, %v1648
        %v2156 = vsel %vm2145, %v2123, %v1650
        %v2157 = vsel %vm2145, %v2124, %v1652
        %v2158 = vsel %vm2145, %v2125, %v1654
        %v2159 = vsel %vm2145, %v2126, %v1656
        %v2160 = vsel %vm2145, %v2127, %v1658
        %v2161 = vsel %vm2145, %v2128, %v1660
        %v2162 = vsel %vm2145, %v2129, %v1662
        %v2163 = vsel %vm2145, %v2130, %v1664
        %v2164 = vsel %vm2145, %v2131, %v1666
        %v2165 = vsel %vm2145, %v2132, %v1668
        %v2166 = vsel %vm2145, %v2133, %v1670
        %v2167 = vsel %vm2145, %v2134, %v1672
        %v2168 = vsel %vm2145, %v2135, %v1674
        %v2169 = vsel %vm2145, %v2136, %v1676
        %v2170 = vsel %vm2145, %v2137, %v1678
        %v2171 = vsel %vm2145, %v2138, %v1680
        %v2172 = vsel %vm2145, %v2139, %v1682
        %v2173 = vsel %vm2145, %v2140, %v1684
        %v2174 = vsel %vm2145, %v2141, %v1686
        %v2175 = vsel %vm2145, %v2142, %v1688
        %v2176 = vsel %vm2145, %v2143, %v1690
        %v2177 = vsel %vm2145, %v2144, %v1692
        %vm2178 = vcmask 457728
        %v2179 = vsel %vm2178, %v2146, %v1758
        %v2180 = vsel %vm2178, %v2147, %v1760
        %v2181 = vsel %vm2178, %v2148, %v1762
        %v2182 = vsel %vm2178, %v2149, %v1764
        %v2183 = vsel %vm2178, %v2150, %v1766
        %v2184 = vsel %vm2178, %v2151, %v1768
        %v2185 = vsel %vm2178, %v2152, %v1770
        %v2186 = vsel %vm2178, %v2153, %v1772
        %v2187 = vsel %vm2178, %v2154, %v1774
        %v2188 = vsel %vm2178, %v2155, %v1776
        %v2189 = vsel %vm2178, %v2156, %v1778
        %v2190 = vsel %vm2178, %v2157, %v1780
        %v2191 = vsel %vm2178, %v2158, %v1782
        %v2192 = vsel %vm2178, %v2159, %v1784
        %v2193 = vsel %vm2178, %v2160, %v1786
        %v2194 = vsel %vm2178, %v2161, %v1788
        %v2195 = vsel %vm2178, %v2162, %v1790
        %v2196 = vsel %vm2178, %v2163, %v1792
        %v2197 = vsel %vm2178, %v2164, %v1794
        %v2198 = vsel %vm2178, %v2165, %v1796
        %v2199 = vsel %vm2178, %v2166, %v1798
        %v2200 = vsel %vm2178, %v2167, %v1800
        %v2201 = vsel %vm2178, %v2168, %v1802
        %v2202 = vsel %vm2178, %v2169, %v1804
        %v2203 = vsel %vm2178, %v2170, %v1806
        %v2204 = vsel %vm2178, %v2171, %v1808
        %v2205 = vsel %vm2178, %v2172, %v1810
        %v2206 = vsel %vm2178, %v2173, %v1812
        %v2207 = vsel %vm2178, %v2174, %v1814
        %v2208 = vsel %vm2178, %v2175, %v1816
        %v2209 = vsel %vm2178, %v2176, %v1818
        %v2210 = vsel %vm2178, %v2177, %v1820
        %vm2211 = vcmask 523264
        %v2212 = vsel %vm2211, %v2179, %v1886
        %v2213 = vsel %vm2211, %v2180, %v1888
        %v2214 = vsel %vm2211, %v2181, %v1890
        %v2215 = vsel %vm2211, %v2182, %v1892
        %v2216 = vsel %vm2211, %v2183, %v1894
        %v2217 = vsel %vm2211, %v2184, %v1896
        %v2218 = vsel %vm2211, %v2185, %v1898
        %v2219 = vsel %vm2211, %v2186, %v1900
        %v2220 = vsel %vm2211, %v2187, %v1902
        %v2221 = vsel %vm2211, %v2188, %v1904
        %v2222 = vsel %vm2211, %v2189, %v1906
        %v2223 = vsel %vm2211, %v2190, %v1908
        %v2224 = vsel %vm2211, %v2191, %v1910
        %v2225 = vsel %vm2211, %v2192, %v1912
        %v2226 = vsel %vm2211, %v2193, %v1914
        %v2227 = vsel %vm2211, %v2194, %v1916
        %v2228 = vsel %vm2211, %v2195, %v1918
        %v2229 = vsel %vm2211, %v2196, %v1920
        %v2230 = vsel %vm2211, %v2197, %v1922
        %v2231 = vsel %vm2211, %v2198, %v1924
        %v2232 = vsel %vm2211, %v2199, %v1926
        %v2233 = vsel %vm2211, %v2200, %v1928
        %v2234 = vsel %vm2211, %v2201, %v1930
        %v2235 = vsel %vm2211, %v2202, %v1932
        %v2236 = vsel %vm2211, %v2203, %v1934
        %v2237 = vsel %vm2211, %v2204, %v1936
        %v2238 = vsel %vm2211, %v2205, %v1938
        %v2239 = vsel %vm2211, %v2206, %v1940
        %v2240 = vsel %vm2211, %v2207, %v1942
        %v2241 = vsel %vm2211, %v2208, %v1944
        %v2242 = vsel %vm2211, %v2209, %v1946
        %v2243 = vsel %vm2211, %v2210, %v1948
        %v2244 = vpack.c.bf16 %v2213, %v2212
        %v2245 = vpack.c.bf16 %v2215, %v2214
        %v2246 = vpack.c.bf16 %v2217, %v2216
        %v2247 = vpack.c.bf16 %v2219, %v2218
        %v2248 = vpack.c.bf16 %v2221, %v2220
        %v2249 = vpack.c.bf16 %v2223, %v2222
        %v2250 = vpack.c.bf16 %v2225, %v2224
        %v2251 = vpack.c.bf16 %v2227, %v2226
        %v2252 = vpack.c.bf16 %v2229, %v2228
        %v2253 = vpack.c.bf16 %v2231, %v2230
        %v2254 = vpack.c.bf16 %v2233, %v2232
        %v2255 = vpack.c.bf16 %v2235, %v2234
        %v2256 = vpack.c.bf16 %v2237, %v2236
        %v2257 = vpack.c.bf16 %v2239, %v2238
        %v2258 = vpack.c.bf16 %v2241, %v2240
        %v2259 = vpack.c.bf16 %v2243, %v2242
        %v2260 = vld [vmem:[%s3] sm:$0xf]
        %v2261 = vld [vmem:[%s3 + $0x4] sm:$0xf]
        %v2262 = vld [vmem:[%s3 + $0x8] sm:$0xf]
        %v2263 = vld [vmem:[%s3 + $0xc] sm:$0xf]
        %v2264 = vld [vmem:[%s3 + $0x10] sm:$0xf]
        %v2265 = vld [vmem:[%s3 + $0x14] sm:$0xf]
        %v2266 = vld [vmem:[%s3 + $0x18] sm:$0xf]
        %v2267 = vld [vmem:[%s3 + $0x1c] sm:$0xf]
        %v2268 = vld [vmem:[%s3 + $0x20] sm:$0xf]
        %v2269 = vld [vmem:[%s4] sm:$0x1]
        %v2271 = vlaneseq
        %v2272 = vshrl.u32 %v2271, 7
        %v2273 = vsub.s32 0, %v2272
        %v2274 = vrot.slane %v2269, %v2273
        %v2285 = vunpack.c.l.b16 %v2260
        %v2286 = vunpack.c.l.b16 %v2261
        %v2287 = vunpack.c.l.b16 %v2262
        %v2288 = vunpack.c.l.b16 %v2263
        %v2289 = vunpack.c.l.b16 %v2264
        %v2290 = vunpack.c.l.b16 %v2265
        %v2291 = vunpack.c.l.b16 %v2266
        %v2292 = vunpack.c.l.b16 %v2267
        %v2293 = vunpack.c.l.b16 %v2268
        %v2294 = vpack.c.b16 %v2286, %v2285
        %v2295 = vpack.c.b16 %v2288, %v2287
        %v2296 = vpack.c.b16 %v2290, %v2289
        %v2297 = vpack.c.b16 %v2292, %v2291
        %v2298 = vpack.c.b16 %v2293, %v2293
        %vm2303 = vcmask 588800
        %v2305 = vsel %vm2303, %v2244, 0
        %v2308 = vsel %vm2303, %v2245, 0
        %v2311 = vsel %vm2303, %v2246, 0
        %v2314 = vsel %vm2303, %v2247, 0
        %v2317 = vsel %vm2303, %v2248, 0
        %v2320 = vsel %vm2303, %v2249, 0
        %v2323 = vsel %vm2303, %v2250, 0
        %v2326 = vsel %vm2303, %v2251, 0
        %v2329 = vsel %vm2303, %v2252, 0
        %v2332 = vsel %vm2303, %v2253, 0
        %v2335 = vsel %vm2303, %v2254, 0
        %v2338 = vsel %vm2303, %v2255, 0
        %v2341 = vsel %vm2303, %v2256, 0
        %v2344 = vsel %vm2303, %v2257, 0
        %v2347 = vsel %vm2303, %v2258, 0
        %v2350 = vsel %vm2303, %v2259, 0
        %v2353 = vsel %vm383, %v2298, 0
        %2355 = vmatprep.subr.bf16.mxu0 0
        %2356 = vmatpush1.bf16.msra.mxu0 %v2294
        %2357 = vmatprep.subr.bf16.mxu0 0
        %2358 = vmatpush1.bf16.msra.mxu0 %v2295
        %2359 = vmatprep.subr.bf16.mxu0 0
        %2360 = vmatpush1.bf16.msra.mxu0 %v2296
        %2361 = vmatprep.subr.bf16.mxu0 0
        %2362 = vmatpush1.bf16.msra.mxu0 %v2297
        %2363 = vmatprep.subr.bf16.mxu0 0
        %2364 = vmatpush1.bf16.msra.mxu0 %v2353
        %2365 = vmatprep.subr.bf16.mxu0 0
        %2366 = vmatpush1.bf16.msra.mxu0 0
        %2367 = vmatprep.subr.bf16.mxu0 0
        %2368 = vmatpush1.bf16.msra.mxu0 0
        %2369 = vmatprep.subr.bf16.mxu0 0
        %2370 = vmatpush1.bf16.msra.mxu0 0
        %2371 = vmatprep.subr.bf16.mxu0 0
        %2372 = vmatpush1.bf16.msra.mxu0 0
        %2373 = vmatprep.subr.bf16.mxu0 0
        %2374 = vmatpush1.bf16.msra.mxu0 0
        %2375 = vmatprep.subr.bf16.mxu0 0
        %2376 = vmatpush1.bf16.msra.mxu0 0
        %2377 = vmatprep.subr.bf16.mxu0 0
        %2378 = vmatpush1.bf16.msra.mxu0 0
        %2379 = vmatprep.subr.bf16.mxu0 0
        %2380 = vmatpush1.bf16.msra.mxu0 0
        %2381 = vmatprep.subr.bf16.mxu0 0
        %2382 = vmatpush1.bf16.msra.mxu0 0
        %2383 = vmatprep.subr.bf16.mxu0 0
        %2384 = vmatpush1.bf16.msra.mxu0 0
        %2385 = vmatprep.subr.bf16.mxu0 0
        %2386 = vmatpush1.bf16.msra.mxu0 0
        %2387 = vmatprep.mubr.bf16.mxu0 0
        %2388 = vmatmul.mubr.bf16.gmra.mrb[0].mxu0 %v2305
        %v2389 = vpop.f32.mrb[0].mxu0
        %v2390 = vadd.f32 %v2274, %v2389
        %v2391 = vpop.f32.mrb[0].mxu0
        %v2392 = vpop.f32.mrb[0].mxu0
        %v2393 = vadd.f32 %v2274, %v2392
        %v2394 = vpop.f32.mrb[0].mxu0
        %2395 = vmatprep.mubr.bf16.mxu0 0
        %2396 = vmatmul.mubr.bf16.gmra.mrb[0].mxu0 %v2308
        %v2397 = vpop.f32.mrb[0].mxu0
        %v2398 = vadd.f32 %v2274, %v2397
        %v2399 = vpop.f32.mrb[0].mxu0
        %v2400 = vpop.f32.mrb[0].mxu0
        %v2401 = vadd.f32 %v2274, %v2400
        %v2402 = vpop.f32.mrb[0].mxu0
        %2403 = vmatprep.mubr.bf16.mxu0 0
        %2404 = vmatmul.mubr.bf16.gmra.mrb[0].mxu0 %v2311
        %v2405 = vpop.f32.mrb[0].mxu0
        %v2406 = vadd.f32 %v2274, %v2405
        %v2407 = vpop.f32.mrb[0].mxu0
        %v2408 = vpop.f32.mrb[0].mxu0
        %v2409 = vadd.f32 %v2274, %v2408
        %v2410 = vpop.f32.mrb[0].mxu0
        %2411 = vmatprep.mubr.bf16.mxu0 0
        %2412 = vmatmul.mubr.bf16.gmra.mrb[0].mxu0 %v2314
        %v2413 = vpop.f32.mrb[0].mxu0
        %v2414 = vadd.f32 %v2274, %v2413
        %v2415 = vpop.f32.mrb[0].mxu0
        %v2416 = vpop.f32.mrb[0].mxu0
        %v2417 = vadd.f32 %v2274, %v2416
        %v2418 = vpop.f32.mrb[0].mxu0
        %2419 = vmatprep.mubr.bf16.mxu0 0
        %2420 = vmatmul.mubr.bf16.gmra.mrb[0].mxu0 %v2317
        %v2421 = vpop.f32.mrb[0].mxu0
        %v2422 = vadd.f32 %v2274, %v2421
        %v2423 = vpop.f32.mrb[0].mxu0
        %v2424 = vpop.f32.mrb[0].mxu0
        %v2425 = vadd.f32 %v2274, %v2424
        %v2426 = vpop.f32.mrb[0].mxu0
        %2427 = vmatprep.mubr.bf16.mxu0 0
        %2428 = vmatmul.mubr.bf16.gmra.mrb[0].mxu0 %v2320
        %v2429 = vpop.f32.mrb[0].mxu0
        %v2430 = vadd.f32 %v2274, %v2429
        %v2431 = vpop.f32.mrb[0].mxu0
        %v2432 = vpop.f32.mrb[0].mxu0
        %v2433 = vadd.f32 %v2274, %v2432
        %v2434 = vpop.f32.mrb[0].mxu0
        %2435 = vmatprep.mubr.bf16.mxu0 0
        %2436 = vmatmul.mubr.bf16.gmra.mrb[0].mxu0 %v2323
        %v2437 = vpop.f32.mrb[0].mxu0
        %v2438 = vadd.f32 %v2274, %v2437
        %v2439 = vpop.f32.mrb[0].mxu0
        %v2440 = vpop.f32.mrb[0].mxu0
        %v2441 = vadd.f32 %v2274, %v2440
        %v2442 = vpop.f32.mrb[0].mxu0
        %2443 = vmatprep.mubr.bf16.mxu0 0
        %2444 = vmatmul.mubr.bf16.gmra.mrb[0].mxu0 %v2326
        %v2445 = vpop.f32.mrb[0].mxu0
        %v2446 = vadd.f32 %v2274, %v2445
        %v2447 = vpop.f32.mrb[0].mxu0
        %v2448 = vpop.f32.mrb[0].mxu0
        %v2449 = vadd.f32 %v2274, %v2448
        %v2450 = vpop.f32.mrb[0].mxu0
        %2451 = vmatprep.mubr.bf16.mxu0 0
        %2452 = vmatmul.mubr.bf16.gmra.mrb[0].mxu0 %v2329
        %v2453 = vpop.f32.mrb[0].mxu0
        %v2454 = vadd.f32 %v2274, %v2453
        %v2455 = vpop.f32.mrb[0].mxu0
        %v2456 = vpop.f32.mrb[0].mxu0
        %v2457 = vadd.f32 %v2274, %v2456
        %v2458 = vpop.f32.mrb[0].mxu0
        %2459 = vmatprep.mubr.bf16.mxu0 0
        %2460 = vmatmul.mubr.bf16.gmra.mrb[0].mxu0 %v2332
        %v2461 = vpop.f32.mrb[0].mxu0
        %v2462 = vadd.f32 %v2274, %v2461
        %v2463 = vpop.f32.mrb[0].mxu0
        %v2464 = vpop.f32.mrb[0].mxu0
        %v2465 = vadd.f32 %v2274, %v2464
        %v2466 = vpop.f32.mrb[0].mxu0
        %2467 = vmatprep.mubr.bf16.mxu0 0
        %2468 = vmatmul.mubr.bf16.gmra.mrb[0].mxu0 %v2335
        %v2469 = vpop.f32.mrb[0].mxu0
        %v2470 = vadd.f32 %v2274, %v2469
        %v2471 = vpop.f32.mrb[0].mxu0
        %v2472 = vpop.f32.mrb[0].mxu0
        %v2473 = vadd.f32 %v2274, %v2472
        %v2474 = vpop.f32.mrb[0].mxu0
        %2475 = vmatprep.mubr.bf16.mxu0 0
        %2476 = vmatmul.mubr.bf16.gmra.mrb[0].mxu0 %v2338
        %v2477 = vpop.f32.mrb[0].mxu0
        %v2478 = vadd.f32 %v2274, %v2477
        %v2479 = vpop.f32.mrb[0].mxu0
        %v2480 = vpop.f32.mrb[0].mxu0
        %v2481 = vadd.f32 %v2274, %v2480
        %v2482 = vpop.f32.mrb[0].mxu0
        %2483 = vmatprep.mubr.bf16.mxu0 0
        %2484 = vmatmul.mubr.bf16.gmra.mrb[0].mxu0 %v2341
        %v2485 = vpop.f32.mrb[0].mxu0
        %v2486 = vadd.f32 %v2274, %v2485
        %v2487 = vpop.f32.mrb[0].mxu0
        %v2488 = vpop.f32.mrb[0].mxu0
        %v2489 = vadd.f32 %v2274, %v2488
        %v2490 = vpop.f32.mrb[0].mxu0
        %2491 = vmatprep.mubr.bf16.mxu0 0
        %2492 = vmatmul.mubr.bf16.gmra.mrb[0].mxu0 %v2344
        %v2493 = vpop.f32.mrb[0].mxu0
        %v2494 = vadd.f32 %v2274, %v2493
        %v2495 = vpop.f32.mrb[0].mxu0
        %v2496 = vpop.f32.mrb[0].mxu0
        %v2497 = vadd.f32 %v2274, %v2496
        %v2498 = vpop.f32.mrb[0].mxu0
        %2499 = vmatprep.mubr.bf16.mxu0 0
        %2500 = vmatmul.mubr.bf16.gmra.mrb[0].mxu0 %v2347
        %v2501 = vpop.f32.mrb[0].mxu0
        %v2502 = vadd.f32 %v2274, %v2501
        %v2503 = vpop.f32.mrb[0].mxu0
        %v2504 = vpop.f32.mrb[0].mxu0
        %v2505 = vadd.f32 %v2274, %v2504
        %v2506 = vpop.f32.mrb[0].mxu0
        %2507 = vmatprep.mubr.bf16.mxu0 0
        %2508 = vmatmul.mubr.bf16.gmra.mrb[0].mxu0 %v2350
        %v2509 = vpop.f32.mrb[0].mxu0
        %v2510 = vadd.f32 %v2274, %v2509
        %v2511 = vpop.f32.mrb[0].mxu0
        %v2512 = vpop.f32.mrb[0].mxu0
        %v2513 = vadd.f32 %v2274, %v2512
        %v2514 = vpop.f32.mrb[0].mxu0
        %2515 = vdwg.mxu0
        %2548 = vrot.lane.b32.xlu0 %v278, 8
        %v2549 = vpop.permute.xlu0 %2548
        %2550 = vrot.lane.b32.xlu0 %v279, 8
        %v2551 = vpop.permute.xlu0 %2550
        %2552 = vrot.lane.b32.xlu0 %v280, 8
        %v2553 = vpop.permute.xlu0 %2552
        %2554 = vrot.lane.b32.xlu0 %v281, 8
        %v2555 = vpop.permute.xlu0 %2554
        %2556 = vrot.lane.b32.xlu0 %v282, 8
        %v2557 = vpop.permute.xlu0 %2556
        %2558 = vrot.lane.b32.xlu0 %v283, 8
        %v2559 = vpop.permute.xlu0 %2558
        %2560 = vrot.lane.b32.xlu0 %v284, 8
        %v2561 = vpop.permute.xlu0 %2560
        %2562 = vrot.lane.b32.xlu0 %v285, 8
        %v2563 = vpop.permute.xlu0 %2562
        %2564 = vrot.lane.b32.xlu0 %v286, 8
        %v2565 = vpop.permute.xlu0 %2564
        %2566 = vrot.lane.b32.xlu0 %v287, 8
        %v2567 = vpop.permute.xlu0 %2566
        %2568 = vrot.lane.b32.xlu0 %v288, 8
        %v2569 = vpop.permute.xlu0 %2568
        %2570 = vrot.lane.b32.xlu0 %v289, 8
        %v2571 = vpop.permute.xlu0 %2570
        %2572 = vrot.lane.b32.xlu0 %v290, 8
        %v2573 = vpop.permute.xlu0 %2572
        %2574 = vrot.lane.b32.xlu0 %v291, 8
        %v2575 = vpop.permute.xlu0 %2574
        %2576 = vrot.lane.b32.xlu0 %v292, 8
        %v2577 = vpop.permute.xlu0 %2576
        %2578 = vrot.lane.b32.xlu0 %v293, 8
        %v2579 = vpop.permute.xlu0 %2578
        %2580 = vrot.lane.b32.xlu0 %v294, 8
        %v2581 = vpop.permute.xlu0 %2580
        %2582 = vrot.lane.b32.xlu0 %v295, 8
        %v2583 = vpop.permute.xlu0 %2582
        %2584 = vrot.lane.b32.xlu0 %v296, 8
        %v2585 = vpop.permute.xlu0 %2584
        %2586 = vrot.lane.b32.xlu0 %v297, 8
        %v2587 = vpop.permute.xlu0 %2586
        %2588 = vrot.lane.b32.xlu0 %v298, 8
        %v2589 = vpop.permute.xlu0 %2588
        %2590 = vrot.lane.b32.xlu0 %v299, 8
        %v2591 = vpop.permute.xlu0 %2590
        %2592 = vrot.lane.b32.xlu0 %v300, 8
        %v2593 = vpop.permute.xlu0 %2592
        %2594 = vrot.lane.b32.xlu0 %v301, 8
        %v2595 = vpop.permute.xlu0 %2594
        %2596 = vrot.lane.b32.xlu0 %v302, 8
        %v2597 = vpop.permute.xlu0 %2596
        %2598 = vrot.lane.b32.xlu0 %v303, 8
        %v2599 = vpop.permute.xlu0 %2598
        %2600 = vrot.lane.b32.xlu0 %v304, 8
        %v2601 = vpop.permute.xlu0 %2600
        %2602 = vrot.lane.b32.xlu0 %v305, 8
        %v2603 = vpop.permute.xlu0 %2602
        %2604 = vrot.lane.b32.xlu0 %v306, 8
        %v2605 = vpop.permute.xlu0 %2604
        %2606 = vrot.lane.b32.xlu0 %v307, 8
        %v2607 = vpop.permute.xlu0 %2606
        %2608 = vrot.lane.b32.xlu0 %v308, 8
        %v2609 = vpop.permute.xlu0 %2608
        %2610 = vrot.lane.b32.xlu0 %v309, 8
        %v2611 = vpop.permute.xlu0 %2610
        %v2644 = vsel %vm334, %v2390, %v2549
        %v2645 = vsel %vm334, %v2393, %v2551
        %v2646 = vsel %vm334, %v2398, %v2553
        %v2647 = vsel %vm334, %v2401, %v2555
        %v2648 = vsel %vm334, %v2406, %v2557
        %v2649 = vsel %vm334, %v2409, %v2559
        %v2650 = vsel %vm334, %v2414, %v2561
        %v2651 = vsel %vm334, %v2417, %v2563
        %v2652 = vsel %vm334, %v2422, %v2565
        %v2653 = vsel %vm334, %v2425, %v2567
        %v2654 = vsel %vm334, %v2430, %v2569
        %v2655 = vsel %vm334, %v2433, %v2571
        %v2656 = vsel %vm334, %v2438, %v2573
        %v2657 = vsel %vm334, %v2441, %v2575
        %v2658 = vsel %vm334, %v2446, %v2577
        %v2659 = vsel %vm334, %v2449, %v2579
        %v2660 = vsel %vm334, %v2454, %v2581
        %v2661 = vsel %vm334, %v2457, %v2583
        %v2662 = vsel %vm334, %v2462, %v2585
        %v2663 = vsel %vm334, %v2465, %v2587
        %v2664 = vsel %vm334, %v2470, %v2589
        %v2665 = vsel %vm334, %v2473, %v2591
        %v2666 = vsel %vm334, %v2478, %v2593
        %v2667 = vsel %vm334, %v2481, %v2595
        %v2668 = vsel %vm334, %v2486, %v2597
        %v2669 = vsel %vm334, %v2489, %v2599
        %v2670 = vsel %vm334, %v2494, %v2601
        %v2671 = vsel %vm334, %v2497, %v2603
        %v2672 = vsel %vm334, %v2502, %v2605
        %v2673 = vsel %vm334, %v2505, %v2607
        %v2674 = vsel %vm334, %v2510, %v2609
        %v2675 = vsel %vm334, %v2513, %v2611
        %v2676 = vpack.c.bf16 %v2645, %v2644
        %v2677 = vpack.c.bf16 %v2647, %v2646
        %v2678 = vpack.c.bf16 %v2649, %v2648
        %v2679 = vpack.c.bf16 %v2651, %v2650
        %v2680 = vpack.c.bf16 %v2653, %v2652
        %v2681 = vpack.c.bf16 %v2655, %v2654
        %v2682 = vpack.c.bf16 %v2657, %v2656
        %v2683 = vpack.c.bf16 %v2659, %v2658
        %v2684 = vpack.c.bf16 %v2661, %v2660
        %v2685 = vpack.c.bf16 %v2663, %v2662
        %v2686 = vpack.c.bf16 %v2665, %v2664
        %v2687 = vpack.c.bf16 %v2667, %v2666
        %v2688 = vpack.c.bf16 %v2669, %v2668
        %v2689 = vpack.c.bf16 %v2671, %v2670
        %v2690 = vpack.c.bf16 %v2673, %v2672
        %v2691 = vpack.c.bf16 %v2675, %v2674
        %v2692 = vld [vmem:[%s5] sm:$0xf]
        %v2693 = vld [vmem:[%s5 + $0x4] sm:$0xf]
        %v2694 = vld [vmem:[%s6] sm:$0x1]
        %v2696 = vlaneseq
        %v2697 = vshrl.u32 %v2696, 7
        %v2698 = vsub.s32 0, %v2697
        %v2699 = vrot.slane %v2694, %v2698
        %v2703 = vunpack.c.l.b16 %v2692
        %v2704 = vunpack.c.l.b16 %v2693
        %v2705 = vpack.c.b16 %v2704, %v2703
        %v2708 = vsel %vm2013, %v2676, 0
        %v2711 = vsel %vm2013, %v2677, 0
        %v2714 = vsel %vm2013, %v2678, 0
        %v2717 = vsel %vm2013, %v2679, 0
        %v2720 = vsel %vm2013, %v2680, 0
        %v2723 = vsel %vm2013, %v2681, 0
        %v2726 = vsel %vm2013, %v2682, 0
        %v2729 = vsel %vm2013, %v2683, 0
        %v2732 = vsel %vm2013, %v2684, 0
        %v2735 = vsel %vm2013, %v2685, 0
        %v2738 = vsel %vm2013, %v2686, 0
        %v2741 = vsel %vm2013, %v2687, 0
        %v2744 = vsel %vm2013, %v2688, 0
        %v2747 = vsel %vm2013, %v2689, 0
        %v2750 = vsel %vm2013, %v2690, 0
        %v2753 = vsel %vm2013, %v2691, 0
        %2755 = vmatprep.subr.bf16.mxu0 0
        %2756 = vmatpush1.bf16.msra.mxu0 %v2705
        %2757 = vmatprep.subr.bf16.mxu0 0
        %2758 = vmatpush1.bf16.msra.mxu0 0
        %2759 = vmatprep.subr.bf16.mxu0 0
        %2760 = vmatpush1.bf16.msra.mxu0 0
        %2761 = vmatprep.subr.bf16.mxu0 0
        %2762 = vmatpush1.bf16.msra.mxu0 0
        %2763 = vmatprep.subr.bf16.mxu0 0
        %2764 = vmatpush1.bf16.msra.mxu0 0
        %2765 = vmatprep.subr.bf16.mxu0 0
        %2766 = vmatpush1.bf16.msra.mxu0 0
        %2767 = vmatprep.subr.bf16.mxu0 0
        %2768 = vmatpush1.bf16.msra.mxu0 0
        %2769 = vmatprep.subr.bf16.mxu0 0
        %2770 = vmatpush1.bf16.msra.mxu0 0
        %2771 = vmatprep.subr.bf16.mxu0 0
        %2772 = vmatpush1.bf16.msra.mxu0 0
        %2773 = vmatprep.subr.bf16.mxu0 0
        %2774 = vmatpush1.bf16.msra.mxu0 0
        %2775 = vmatprep.subr.bf16.mxu0 0
        %2776 = vmatpush1.bf16.msra.mxu0 0
        %2777 = vmatprep.subr.bf16.mxu0 0
        %2778 = vmatpush1.bf16.msra.mxu0 0
        %2779 = vmatprep.subr.bf16.mxu0 0
        %2780 = vmatpush1.bf16.msra.mxu0 0
        %2781 = vmatprep.subr.bf16.mxu0 0
        %2782 = vmatpush1.bf16.msra.mxu0 0
        %2783 = vmatprep.subr.bf16.mxu0 0
        %2784 = vmatpush1.bf16.msra.mxu0 0
        %2785 = vmatprep.subr.bf16.mxu0 0
        %2786 = vmatpush1.bf16.msra.mxu0 0
        %2787 = vmatprep.mubr.bf16.mxu0 0
        %2788 = vmatmul.mubr.bf16.gmra.mrb[0].mxu0 %v2708
        %v2789 = vpop.f32.mrb[0].mxu0
        %v2790 = vadd.f32 %v2699, %v2789
        %v2791 = vpop.f32.mrb[0].mxu0
        %v2792 = vpop.f32.mrb[0].mxu0
        %v2793 = vadd.f32 %v2699, %v2792
        %v2794 = vpop.f32.mrb[0].mxu0
        %2795 = vmatprep.mubr.bf16.mxu0 0
        %2796 = vmatmul.mubr.bf16.gmra.mrb[0].mxu0 %v2711
        %v2797 = vpop.f32.mrb[0].mxu0
        %v2798 = vadd.f32 %v2699, %v2797
        %v2799 = vpop.f32.mrb[0].mxu0
        %v2800 = vpop.f32.mrb[0].mxu0
        %v2801 = vadd.f32 %v2699, %v2800
        %v2802 = vpop.f32.mrb[0].mxu0
        %2803 = vmatprep.mubr.bf16.mxu0 0
        %2804 = vmatmul.mubr.bf16.gmra.mrb[0].mxu0 %v2714
        %v2805 = vpop.f32.mrb[0].mxu0
        %v2806 = vadd.f32 %v2699, %v2805
        %v2807 = vpop.f32.mrb[0].mxu0
        %v2808 = vpop.f32.mrb[0].mxu0
        %v2809 = vadd.f32 %v2699, %v2808
        %v2810 = vpop.f32.mrb[0].mxu0
        %2811 = vmatprep.mubr.bf16.mxu0 0
        %2812 = vmatmul.mubr.bf16.gmra.mrb[0].mxu0 %v2717
        %v2813 = vpop.f32.mrb[0].mxu0
        %v2814 = vadd.f32 %v2699, %v2813
        %v2815 = vpop.f32.mrb[0].mxu0
        %v2816 = vpop.f32.mrb[0].mxu0
        %v2817 = vadd.f32 %v2699, %v2816
        %v2818 = vpop.f32.mrb[0].mxu0
        %2819 = vmatprep.mubr.bf16.mxu0 0
        %2820 = vmatmul.mubr.bf16.gmra.mrb[0].mxu0 %v2720
        %v2821 = vpop.f32.mrb[0].mxu0
        %v2822 = vadd.f32 %v2699, %v2821
        %v2823 = vpop.f32.mrb[0].mxu0
        %v2824 = vpop.f32.mrb[0].mxu0
        %v2825 = vadd.f32 %v2699, %v2824
        %v2826 = vpop.f32.mrb[0].mxu0
        %2827 = vmatprep.mubr.bf16.mxu0 0
        %2828 = vmatmul.mubr.bf16.gmra.mrb[0].mxu0 %v2723
        %v2829 = vpop.f32.mrb[0].mxu0
        %v2830 = vadd.f32 %v2699, %v2829
        %v2831 = vpop.f32.mrb[0].mxu0
        %v2832 = vpop.f32.mrb[0].mxu0
        %v2833 = vadd.f32 %v2699, %v2832
        %v2834 = vpop.f32.mrb[0].mxu0
        %2835 = vmatprep.mubr.bf16.mxu0 0
        %2836 = vmatmul.mubr.bf16.gmra.mrb[0].mxu0 %v2726
        %v2837 = vpop.f32.mrb[0].mxu0
        %v2838 = vadd.f32 %v2699, %v2837
        %v2839 = vpop.f32.mrb[0].mxu0
        %v2840 = vpop.f32.mrb[0].mxu0
        %v2841 = vadd.f32 %v2699, %v2840
        %v2842 = vpop.f32.mrb[0].mxu0
        %2843 = vmatprep.mubr.bf16.mxu0 0
        %2844 = vmatmul.mubr.bf16.gmra.mrb[0].mxu0 %v2729
        %v2845 = vpop.f32.mrb[0].mxu0
        %v2846 = vadd.f32 %v2699, %v2845
        %v2847 = vpop.f32.mrb[0].mxu0
        %v2848 = vpop.f32.mrb[0].mxu0
        %v2849 = vadd.f32 %v2699, %v2848
        %v2850 = vpop.f32.mrb[0].mxu0
        %2851 = vmatprep.mubr.bf16.mxu0 0
        %2852 = vmatmul.mubr.bf16.gmra.mrb[0].mxu0 %v2732
        %v2853 = vpop.f32.mrb[0].mxu0
        %v2854 = vadd.f32 %v2699, %v2853
        %v2855 = vpop.f32.mrb[0].mxu0
        %v2856 = vpop.f32.mrb[0].mxu0
        %v2857 = vadd.f32 %v2699, %v2856
        %v2858 = vpop.f32.mrb[0].mxu0
        %2859 = vmatprep.mubr.bf16.mxu0 0
        %2860 = vmatmul.mubr.bf16.gmra.mrb[0].mxu0 %v2735
        %v2861 = vpop.f32.mrb[0].mxu0
        %v2862 = vadd.f32 %v2699, %v2861
        %v2863 = vpop.f32.mrb[0].mxu0
        %v2864 = vpop.f32.mrb[0].mxu0
        %v2865 = vadd.f32 %v2699, %v2864
        %v2866 = vpop.f32.mrb[0].mxu0
        %2867 = vmatprep.mubr.bf16.mxu0 0
        %2868 = vmatmul.mubr.bf16.gmra.mrb[0].mxu0 %v2738
        %v2869 = vpop.f32.mrb[0].mxu0
        %v2870 = vadd.f32 %v2699, %v2869
        %v2871 = vpop.f32.mrb[0].mxu0
        %v2872 = vpop.f32.mrb[0].mxu0
        %v2873 = vadd.f32 %v2699, %v2872
        %v2874 = vpop.f32.mrb[0].mxu0
        %2875 = vmatprep.mubr.bf16.mxu0 0
        %2876 = vmatmul.mubr.bf16.gmra.mrb[0].mxu0 %v2741
        %v2877 = vpop.f32.mrb[0].mxu0
        %v2878 = vadd.f32 %v2699, %v2877
        %v2879 = vpop.f32.mrb[0].mxu0
        %v2880 = vpop.f32.mrb[0].mxu0
        %v2881 = vadd.f32 %v2699, %v2880
        %v2882 = vpop.f32.mrb[0].mxu0
        %2883 = vmatprep.mubr.bf16.mxu0 0
        %2884 = vmatmul.mubr.bf16.gmra.mrb[0].mxu0 %v2744
        %v2885 = vpop.f32.mrb[0].mxu0
        %v2886 = vadd.f32 %v2699, %v2885
        %v2887 = vpop.f32.mrb[0].mxu0
        %v2888 = vpop.f32.mrb[0].mxu0
        %v2889 = vadd.f32 %v2699, %v2888
        %v2890 = vpop.f32.mrb[0].mxu0
        %2891 = vmatprep.mubr.bf16.mxu0 0
        %2892 = vmatmul.mubr.bf16.gmra.mrb[0].mxu0 %v2747
        %v2893 = vpop.f32.mrb[0].mxu0
        %v2894 = vadd.f32 %v2699, %v2893
        %v2895 = vpop.f32.mrb[0].mxu0
        %v2896 = vpop.f32.mrb[0].mxu0
        %v2897 = vadd.f32 %v2699, %v2896
        %v2898 = vpop.f32.mrb[0].mxu0
        %2899 = vmatprep.mubr.bf16.mxu0 0
        %2900 = vmatmul.mubr.bf16.gmra.mrb[0].mxu0 %v2750
        %v2901 = vpop.f32.mrb[0].mxu0
        %v2902 = vadd.f32 %v2699, %v2901
        %v2903 = vpop.f32.mrb[0].mxu0
        %v2904 = vpop.f32.mrb[0].mxu0
        %v2905 = vadd.f32 %v2699, %v2904
        %v2906 = vpop.f32.mrb[0].mxu0
        %2907 = vmatprep.mubr.bf16.mxu0 0
        %2908 = vmatmul.mubr.bf16.gmra.mrb[0].mxu0 %v2753
        %v2909 = vpop.f32.mrb[0].mxu0
        %v2910 = vadd.f32 %v2699, %v2909
        %v2911 = vpop.f32.mrb[0].mxu0
        %v2912 = vpop.f32.mrb[0].mxu0
        %v2913 = vadd.f32 %v2699, %v2912
        %v2914 = vpop.f32.mrb[0].mxu0
        %2915 = vdwg.mxu0
        %2916 = vst.msk [vmem:[%s271] sm:$0xff] %vm2013, %v2790
        %2917 = vst.msk [vmem:[%s271 + $0x8] sm:$0xff] %vm2013, %v2793
        %2918 = vst.msk [vmem:[%s271 + $0x10] sm:$0xff] %vm2013, %v2798
        %2919 = vst.msk [vmem:[%s271 + $0x18] sm:$0xff] %vm2013, %v2801
        %2920 = vst.msk [vmem:[%s271 + $0x20] sm:$0xff] %vm2013, %v2806
        %2921 = vst.msk [vmem:[%s271 + $0x28] sm:$0xff] %vm2013, %v2809
        %2922 = vst.msk [vmem:[%s271 + $0x30] sm:$0xff] %vm2013, %v2814
        %2923 = vst.msk [vmem:[%s271 + $0x38] sm:$0xff] %vm2013, %v2817
        %2924 = vst.msk [vmem:[%s271 + $0x40] sm:$0xff] %vm2013, %v2822
        %2925 = vst.msk [vmem:[%s271 + $0x48] sm:$0xff] %vm2013, %v2825
        %2926 = vst.msk [vmem:[%s271 + $0x50] sm:$0xff] %vm2013, %v2830
        %2927 = vst.msk [vmem:[%s271 + $0x58] sm:$0xff] %vm2013, %v2833
        %2928 = vst.msk [vmem:[%s271 + $0x60] sm:$0xff] %vm2013, %v2838
        %2929 = vst.msk [vmem:[%s271 + $0x68] sm:$0xff] %vm2013, %v2841
        %2930 = vst.msk [vmem:[%s271 + $0x70] sm:$0xff] %vm2013, %v2846
        %2931 = vst.msk [vmem:[%s271 + $0x78] sm:$0xff] %vm2013, %v2849
        %2932 = vst.msk [vmem:[%s271 + $0x80] sm:$0xff] %vm2013, %v2854
        %2933 = vst.msk [vmem:[%s271 + $0x88] sm:$0xff] %vm2013, %v2857
        %2934 = vst.msk [vmem:[%s271 + $0x90] sm:$0xff] %vm2013, %v2862
        %2935 = vst.msk [vmem:[%s271 + $0x98] sm:$0xff] %vm2013, %v2865
        %2936 = vst.msk [vmem:[%s271 + $0xa0] sm:$0xff] %vm2013, %v2870
        %2937 = vst.msk [vmem:[%s271 + $0xa8] sm:$0xff] %vm2013, %v2873
        %2938 = vst.msk [vmem:[%s271 + $0xb0] sm:$0xff] %vm2013, %v2878
        %2939 = vst.msk [vmem:[%s271 + $0xb8] sm:$0xff] %vm2013, %v2881
        %2940 = vst.msk [vmem:[%s271 + $0xc0] sm:$0xff] %vm2013, %v2886
        %2941 = vst.msk [vmem:[%s271 + $0xc8] sm:$0xff] %vm2013, %v2889
        %2942 = vst.msk [vmem:[%s271 + $0xd0] sm:$0xff] %vm2013, %v2894
        %2943 = vst.msk [vmem:[%s271 + $0xd8] sm:$0xff] %vm2013, %v2897
        %2944 = vst.msk [vmem:[%s271 + $0xe0] sm:$0xff] %vm2013, %v2902
        %2945 = vst.msk [vmem:[%s271 + $0xe8] sm:$0xff] %vm2013, %v2905
        %2946 = vst.msk [vmem:[%s271 + $0xf0] sm:$0xff] %vm2013, %v2910
        %2947 = vst.msk [vmem:[%s271 + $0xf8] sm:$0xff] %vm2013, %v2913
        %s2948 = sand.u32 %s181, 1
        %s2949 = scalar_lea.sflag [#allocation4], %s2948
        %s2950 = sand.u32 %s181, 1
        %s2951 = smul.addr %s2950, 256
        %s2952 = scalar_lea.vmem [#allocation3], %s2951
        // Predicated region
        $region49: #{tpu_custom_call.1} parent=47 // pred_check
          %p2953 = pneg %p191
        $region50: #{tpu_custom_call.1} parent=47 // pred_check_branch
          %2955 = sbr.rel (%p2953) target = $region52
        $region51: #{tpu_custom_call.1} parent=47 // pred_region
          %s2957 = ssub.s32 4096, 4096
          %2958 = vsyncadd %s2949, %s2957
          %s2959 = smul.addr %s21, 32
          %s2960 = smul.addr %s2959, 128
          %s2961 = scalar_lea.hbm %s7, %s2960
          %s2962 = sshll.u32 %s2952, 4
          %s2963 = int_to_ptr.vmem [resolvable:$true] %s2962
          %2968 = dma.vmem_to_hbm [thread:$0]  %s2963, 4096, %s2961, %s2949, 128, 128, 8
        $region52: #{tpu_custom_call.1} parent=47 // pred_fallthru
          _
      $region48: #{tpu_custom_call.1} parent=5 // pred_fallthru
        _
      %p2969 = scmp.le.s32.totalorder 2, %s16
      // Predicated region
      $region53: #{tpu_custom_call.1} parent=5 // pred_check
        %p2970 = pneg %p2969
      $region54: #{tpu_custom_call.1} parent=5 // pred_check_branch
        %2972 = sbr.rel (%p2970) target = $region56
      $region55: #{tpu_custom_call.1} parent=5 // pred_region
        %s2973 = ssub.s32 %s16, 2
        // Predicated region
        $region57: #{tpu_custom_call.1} parent=55 // pred_check
          %p2974 = pneg %p197
        $region58: #{tpu_custom_call.1} parent=55 // pred_check_branch
          %2976 = sbr.rel (%p2974) target = $region60
        $region59: #{tpu_custom_call.1} parent=55 // pred_region
          %s2977 = sand.u32 %s182, 1
          %s2978 = scalar_lea.sflag [#allocation4], %s2977
          %s2979 = sand.u32 %s182, 1
          %s2980 = smul.addr %s2979, 256
          %s2981 = scalar_lea.vmem [#allocation3], %s2980
          %2982 = dma.done %s2978, 4096
        $region60: #{tpu_custom_call.1} parent=55 // pred_fallthru
          _
      $region56: #{tpu_custom_call.1} parent=5 // pred_fallthru
        _
    $region6: #{tpu_custom_call.1} parent=1 // loop_footer
      %s20 = sadd.s32 1, %s16
    $region7: #{tpu_custom_call.1} parent=1 // loop_footer_branch
      %15 = sbr.rel target = $region3
    $region8: #{tpu_custom_call.1} parent=1 // loop_exit
      _
    %2983 = vsyncpa [#allocation4], 1
    %s2984 = scalar_lea.sflag [#allocation4], 1
    %2985 = vsyncpa %s2984, 1

</llo_original>
